<compile_context>
chip_gen: v5e
topology: v5e:2x2
jax: 0.10.0
libtpu: 0.0.40
codegen_flags: <defaults>
</compile_context>

<pallas_src>
import math

import numpy as np
import jax
import jax.numpy as jnp
from jax import lax
from jax.experimental import pallas as pl
from jax.experimental.pallas import tpu as pltpu

# Small, self-consistent hyperparameters (module defaults are 1024/128/128/8/2048).
D_MODEL, D_K, D_V, NH, D_FF = 32, 8, 8, 4, 64
B = 2
HG, WG = 4, 4                   # token grid for the LocalPerceptron
N = HG * WG                     # sequence length = 16
BN = B * N                      # all batches processed as one block
LN_EPS = 1e-5                   # PyTorch nn.LayerNorm default eps
_GELU_C = math.sqrt(2.0 / math.pi)
_INV_SQRT_DK = 1.0 / math.sqrt(D_K)
_NEG = -1e30

# depthwise 3x3 taps, row-major; tap k corresponds to PyTorch (C,1,3,3)[:,0,di+1,dj+1]
_TAPS = tuple((di, dj) for di in (-1, 0, 1) for dj in (-1, 0, 1))

# row indices inside the (VEC_ROWS, D_MODEL) bias/LN/depthwise slab
(_BQ, _BK, _BV, _BO, _L1G, _L1B, _DWB, _PWB, _L2G, _L2B, _B2, _L3G, _L3B) = range(13)
_DW0 = 13                       # rows 13..21: depthwise tap weights (per-channel)
VEC_ROWS = _DW0 + 9


def _ln(y, gamma, beta):
    mu = jnp.mean(y, axis=-1, keepdims=True)
    var = jnp.mean((y - mu) ** 2, axis=-1, keepdims=True)
    return (y - mu) * lax.rsqrt(var + LN_EPS) * gamma + beta


# ---------------------------------------------------------------------------
# Single fused kernel: MHA + LN1 + LocalPerceptron + LN2 + FFN + LN3
# ---------------------------------------------------------------------------
def encoder_layer_kernel(xq_ref, xk_ref, xv_ref, bias_ref, w32_ref, wff_ref,
                         vec_ref, dwm_ref, out_ref):
    xq = xq_ref[...]                                   # (BN, D)
    xk = xk_ref[...]
    xv = xv_ref[...]
    vec = vec_ref[...]                                 # (VEC_ROWS, D) bias/LN/tap slab

    def row(i):                                        # (1, D) broadcastable row
        return vec[i:i + 1, :]

    # ------------------- multi-head attention (packed projections) -------------------
    q_all = jnp.dot(xq, w32_ref[0], preferred_element_type=jnp.float32) + row(_BQ)
    k_all = jnp.dot(xk, w32_ref[1], preferred_element_type=jnp.float32) + row(_BK)
    v_all = jnp.dot(xv, w32_ref[2], preferred_element_type=jnp.float32) + row(_BV)

    heads = []
    for h in range(NH):                                # static unroll over heads
        qh = q_all[:, h * D_K:(h + 1) * D_K]           # static 8-lane slices
        kh = k_all[:, h * D_K:(h + 1) * D_K]
        vh = v_all[:, h * D_V:(h + 1) * D_V]
        # block-diagonal (BN,BN) scores; cross-batch + attention-mask entries carry
        # -1e30 in the bias, so they exp to exactly 0 after max-subtraction.
        s = lax.dot_general(qh, kh, (((1,), (1,)), ((), ())),
                            preferred_element_type=jnp.float32) * _INV_SQRT_DK
        s = s + bias_ref[h]
        e = jnp.exp(s - jnp.max(s, axis=-1, keepdims=True))
        p = e * pl.reciprocal(jnp.sum(e, axis=-1, keepdims=True), approx=True)
        heads.append(jnp.dot(p, vh, preferred_element_type=jnp.float32))   # (BN, D_V)
    oc = jnp.concatenate(heads, axis=-1)               # lane concat in registers
    att = jnp.dot(oc, w32_ref[3], preferred_element_type=jnp.float32) + row(_BO)
    att1 = _ln(xq + att, row(_L1G), row(_L1B))         # residual + LN1

    # ------------- LocalPerceptron: depthwise 3x3 conv + GELU + 1x1 conv -------------
    # Token t sits at grid (row, col) = ((t % N)//WG, t % WG); neighbor (di,dj) is at
    # flattened offset delta = di*WG + dj.  pltpu.roll wraps around the (BN) buffer, but
    # every wrapped / cross-batch row is zeroed by the precomputed validity mask.
    dwm = dwm_ref[...]                                 # (BN, 9) 0/1 validity masks
    acc = att1 * row(_DW0 + 4)                         # center tap: no shift, always valid
    for k, (di, dj) in enumerate(_TAPS):
        if di == 0 and dj == 0:
            continue
        delta = di * WG + dj
        shifted = pltpu.roll(att1, shift=(-delta) % BN, axis=0)   # y[t] = x[(t+delta)%BN]
        acc = acc + (shifted * dwm[:, k:k + 1]) * row(_DW0 + k)
    acc = acc + row(_DWB)
    # tanh-approx GELU (EUP tanh; hoisted constants)
    g2 = acc * acc
    gel = 0.5 * acc * (1.0 + jnp.tanh(_GELU_C * acc * (1.0 + 0.044715 * g2)))
    lp = jnp.dot(gel, w32_ref[4], preferred_element_type=jnp.float32) + row(_PWB)
    att2 = _ln(att1 + lp, row(_L2G), row(_L2B))        # residual + LN2

    # --------------------------- position-wise feed-forward ---------------------------
    w1 = wff_ref[0:D_MODEL, :]                         # (D, D_FF)
    w2 = wff_ref[D_MODEL:D_MODEL + D_FF, 0:D_MODEL]    # (D_FF, D)
    b1 = wff_ref[D_MODEL + D_FF:D_MODEL + D_FF + 1, :] # (1, D_FF)
    h1 = jnp.maximum(jnp.dot(att2, w1, preferred_element_type=jnp.float32) + b1, 0.0)
    ffo = jnp.dot(h1, w2, preferred_element_type=jnp.float32) + row(_B2)
    out_ref[...] = _ln(att2 + ffo, row(_L3G), row(_L3B))


# ---------------------------------------------------------------------------
# Wrapper
# ---------------------------------------------------------------------------
def encoder_layer(params, queries, keys, values, relative_pos, attention_mask):
    xq = queries.reshape(BN, D_MODEL)
    xk = keys.reshape(BN, D_MODEL)
    xv = values.reshape(BN, D_MODEL)

    # Single small fused op: embed per-batch (rel_pos + mask-fill) blocks on the
    # diagonal of a (NH, BN, BN) bias and put -1e30 on cross-batch blocks.  This is the
    # layout required by the batched block-diagonal attention in the kernel.
    blk = jnp.transpose(relative_pos, (1, 0, 2, 3)) + \
        attention_mask[None].astype(jnp.float32) * _NEG             # (NH, B, N, N)
    eye = jnp.eye(B, dtype=jnp.float32)
    off = (1.0 - jnp.kron(eye, jnp.ones((N, N), jnp.float32))) * _NEG  # (BN, BN)
    bias = jnp.einsum('hbij,bc->hbicj', blk, eye).reshape(NH, BN, BN) + off[None]

    operands = (xq, xk, xv, bias,
                params["w32"], params["wff"], params["vec"], params["dwmask"])

    def full(shape):
        n = len(shape)
        return pl.BlockSpec(shape, lambda i, n=n: (0,) * n)

    out = pl.pallas_call(
        encoder_layer_kernel,
        grid=(1,),                                     # whole working set < 200 KiB VMEM
        in_specs=[full(x.shape) for x in operands],
        out_specs=full((BN, D_MODEL)),
        out_shape=jax.ShapeDtypeStruct((BN, D_MODEL), jnp.float32),
        compiler_params=pltpu.CompilerParams(dimension_semantics=("arbitrary",)),
    )(*operands)
    return out.reshape(B, N, D_MODEL)


# ---------------------------------------------------------------------------
# Parameter construction (packed slabs, one-time host-side cost)
# ---------------------------------------------------------------------------
def _dw_valid_masks():
    """(BN, 9) 0/1: tap k valid for token t (also kills wrapped / cross-batch rolls)."""
    m = np.zeros((BN, 9), np.float32)
    for t in range(BN):
        r, c = (t % N) // WG, t % WG
        for k, (di, dj) in enumerate(_TAPS):
            if 0 <= r + di < HG and 0 <= c + dj < WG:
                m[t, k] = 1.0
    return jnp.asarray(m)


def init_params(key):
    ks = jax.random.split(key, 16)
    s = 0.02

    def rn(k, shape):
        return jax.random.normal(k, shape, jnp.float32) * s

    # "PyTorch-equivalent" weights: nn.Linear weight is (out,in); stored here as
    # (in,out) with attention heads packed along the output/lane axis.
    wq = rn(ks[0], (D_MODEL, NH * D_K)); bq = rn(ks[1], (NH * D_K,))
    wk = rn(ks[2], (D_MODEL, NH * D_K)); bk = rn(ks[3], (NH * D_K,))
    wv = rn(ks[4], (D_MODEL, NH * D_V)); bv = rn(ks[5], (NH * D_V,))
    wo = rn(ks[6], (NH * D_V, D_MODEL)); bo = rn(ks[7], (D_MODEL,))
    dw_w = rn(ks[8], (9, D_MODEL));      dw_b = rn(ks[9], (D_MODEL,))   # depthwise taps
    pw_w = rn(ks[10], (D_MODEL, D_MODEL)); pw_b = rn(ks[11], (D_MODEL,))
    w1 = rn(ks[12], (D_MODEL, D_FF));    b1 = rn(ks[13], (D_FF,))
    w2 = rn(ks[14], (D_FF, D_MODEL));    b2 = rn(ks[15], (D_MODEL,))
    ones = jnp.ones((D_MODEL,), jnp.float32)
    zeros = jnp.zeros((D_MODEL,), jnp.float32)

    # (5, D, D) matmul-weight slab: Wq, Wk, Wv, Wo, pointwise(1x1) conv
    w32 = jnp.stack([wq, wk, wv, wo, pw_w])
    # (D + D_FF + 1, D_FF) FFN slab: rows [0:D]=w1, [D:D+D_FF, :D]=w2, last row = b1
    wff = jnp.zeros((D_MODEL + D_FF + 1, D_FF), jnp.float32)
    wff = wff.at[0:D_MODEL, :].set(w1)
    wff = wff.at[D_MODEL:D_MODEL + D_FF, 0:D_MODEL].set(w2)
    wff = wff.at[D_MODEL + D_FF, :].set(b1)
    # (VEC_ROWS, D) bias / LayerNorm / depthwise-tap slab
    vec = jnp.zeros((VEC_ROWS, D_MODEL), jnp.float32)
    for i, v in {_BQ: bq, _BK: bk, _BV: bv, _BO: bo, _L1G: ones, _L1B: zeros,
                 _DWB: dw_b, _PWB: pw_b, _L2G: ones, _L2B: zeros, _B2: b2,
                 _L3G: ones, _L3B: zeros}.items():
        vec = vec.at[i].set(v)
    vec = vec.at[_DW0:_DW0 + 9].set(dw_w)

    return dict(w32=w32, wff=wff, vec=vec, dwmask=_dw_valid_masks())


if __name__ == "__main__":
    key = jax.random.PRNGKey(0)
    kp, kq, kk, kv, kr = jax.random.split(key, 5)
    params = init_params(kp)

    queries = jax.random.normal(kq, (B, N, D_MODEL), jnp.float32)
    keys_in = jax.random.normal(kk, (B, N, D_MODEL), jnp.float32)
    values = jax.random.normal(kv, (B, N, D_MODEL), jnp.float32)
    relative_pos = jax.random.normal(kr, (B, NH, N, N), jnp.float32) * 0.1
    # attention mask: 1.0 => position is masked; mask the last 3 keys of batch 1
    attention_mask = jnp.zeros((B, N, N), jnp.float32).at[1, :, N - 3:].set(1.0)

    out = encoder_layer(params, queries, keys_in, values, relative_pos, attention_mask)
    out = jax.block_until_ready(out)

    assert out.shape == (B, N, D_MODEL)
    assert bool(jnp.all(jnp.isfinite(out)))
    print("KERNEL_OK")
</pallas_src>

<mosaic_0001>
module attributes {stable_mosaic.version = 11 : i64} {
  func.func @encoder_layer_kernel(%arg0: i32, %arg1: memref<32x32xf32, #tpu.memory_space<vmem>>, %arg2: memref<32x32xf32, #tpu.memory_space<vmem>>, %arg3: memref<32x32xf32, #tpu.memory_space<vmem>>, %arg4: memref<4x32x32xf32, #tpu.memory_space<vmem>>, %arg5: memref<5x32x32xf32, #tpu.memory_space<vmem>>, %arg6: memref<97x64xf32, #tpu.memory_space<vmem>>, %arg7: memref<22x32xf32, #tpu.memory_space<vmem>>, %arg8: memref<32x9xf32, #tpu.memory_space<vmem>>, %arg9: memref<32x32xf32, #tpu.memory_space<vmem>>) attributes {dimension_semantics = [#tpu.dimension_semantics<arbitrary>], iteration_bounds = array<i64: 1>, scalar_prefetch = 0 : i64, scratch_operands = 0 : i64, tpu.core_type = #tpu.core_type<tc>, window_params = [{pipeline_mode = #tpu.pipeline_mode<synchronous>, transform_indices = @transform_0, window_bounds = array<i64: 32, 32>}, {pipeline_mode = #tpu.pipeline_mode<synchronous>, transform_indices = @transform_1, window_bounds = array<i64: 32, 32>}, {pipeline_mode = #tpu.pipeline_mode<synchronous>, transform_indices = @transform_2, window_bounds = array<i64: 32, 32>}, {pipeline_mode = #tpu.pipeline_mode<synchronous>, transform_indices = @transform_3, window_bounds = array<i64: 4, 32, 32>}, {pipeline_mode = #tpu.pipeline_mode<synchronous>, transform_indices = @transform_4, window_bounds = array<i64: 5, 32, 32>}, {pipeline_mode = #tpu.pipeline_mode<synchronous>, transform_indices = @transform_5, window_bounds = array<i64: 97, 64>}, {pipeline_mode = #tpu.pipeline_mode<synchronous>, transform_indices = @transform_6, window_bounds = array<i64: 22, 32>}, {pipeline_mode = #tpu.pipeline_mode<synchronous>, transform_indices = @transform_7, window_bounds = array<i64: 32, 9>}, {pipeline_mode = #tpu.pipeline_mode<synchronous>, transform_indices = @transform_8, window_bounds = array<i64: 32, 32>}]} {
    %c0 = arith.constant 0 : index
    %c0_0 = arith.constant 0 : index
    %0 = vector.load %arg1[%c0, %c0_0] : memref<32x32xf32, #tpu.memory_space<vmem>>, vector<32x32xf32>
    %c0_1 = arith.constant 0 : index
    %c0_2 = arith.constant 0 : index
    %1 = vector.load %arg2[%c0_1, %c0_2] : memref<32x32xf32, #tpu.memory_space<vmem>>, vector<32x32xf32>
    %c0_3 = arith.constant 0 : index
    %c0_4 = arith.constant 0 : index
    %2 = vector.load %arg3[%c0_3, %c0_4] : memref<32x32xf32, #tpu.memory_space<vmem>>, vector<32x32xf32>
    %c0_5 = arith.constant 0 : index
    %c0_6 = arith.constant 0 : index
    %3 = vector.load %arg7[%c0_5, %c0_6] : memref<22x32xf32, #tpu.memory_space<vmem>>, vector<22x32xf32>
    %c0_7 = arith.constant 0 : index
    %c0_8 = arith.constant 0 : index
    %c0_9 = arith.constant 0 : index
    %4 = vector.load %arg5[%c0_7, %c0_8, %c0_9] : memref<5x32x32xf32, #tpu.memory_space<vmem>>, vector<1x32x32xf32>
    %5 = vector.shape_cast %4 : vector<1x32x32xf32> to vector<32x32xf32>
    %cst = arith.constant dense<0.000000e+00> : vector<32x32xf32>
    %6 = tpu.matmul %0, %5, %cst {dimension_numbers = #tpu.dot_dimension_numbers<[1], [0], [0], [1], [0, 0, 1, 1], [], []>} : vector<32x32xf32>, vector<32x32xf32>, vector<32x32xf32> -> vector<32x32xf32>
    %7 = vector.extract_strided_slice %3 {offsets = [0, 0], sizes = [1, 32], strides = [1, 1]} : vector<22x32xf32> to vector<1x32xf32>
    %8 = vector.broadcast %7 : vector<1x32xf32> to vector<32x32xf32>
    %9 = arith.addf %6, %8 : vector<32x32xf32>
    %c1 = arith.constant 1 : index
    %c0_10 = arith.constant 0 : index
    %c0_11 = arith.constant 0 : index
    %10 = vector.load %arg5[%c1, %c0_10, %c0_11] : memref<5x32x32xf32, #tpu.memory_space<vmem>>, vector<1x32x32xf32>
    %11 = vector.shape_cast %10 : vector<1x32x32xf32> to vector<32x32xf32>
    %cst_12 = arith.constant dense<0.000000e+00> : vector<32x32xf32>
    %12 = tpu.matmul %1, %11, %cst_12 {dimension_numbers = #tpu.dot_dimension_numbers<[1], [0], [0], [1], [0, 0, 1, 1], [], []>} : vector<32x32xf32>, vector<32x32xf32>, vector<32x32xf32> -> vector<32x32xf32>
    %13 = vector.extract_strided_slice %3 {offsets = [1, 0], sizes = [1, 32], strides = [1, 1]} : vector<22x32xf32> to vector<1x32xf32>
    %14 = vector.broadcast %13 : vector<1x32xf32> to vector<32x32xf32>
    %15 = arith.addf %12, %14 : vector<32x32xf32>
    %c2 = arith.constant 2 : index
    %c0_13 = arith.constant 0 : index
    %c0_14 = arith.constant 0 : index
    %16 = vector.load %arg5[%c2, %c0_13, %c0_14] : memref<5x32x32xf32, #tpu.memory_space<vmem>>, vector<1x32x32xf32>
    %17 = vector.shape_cast %16 : vector<1x32x32xf32> to vector<32x32xf32>
    %cst_15 = arith.constant dense<0.000000e+00> : vector<32x32xf32>
    %18 = tpu.matmul %2, %17, %cst_15 {dimension_numbers = #tpu.dot_dimension_numbers<[1], [0], [0], [1], [0, 0, 1, 1], [], []>} : vector<32x32xf32>, vector<32x32xf32>, vector<32x32xf32> -> vector<32x32xf32>
    %19 = vector.extract_strided_slice %3 {offsets = [2, 0], sizes = [1, 32], strides = [1, 1]} : vector<22x32xf32> to vector<1x32xf32>
    %20 = vector.broadcast %19 : vector<1x32xf32> to vector<32x32xf32>
    %21 = arith.addf %18, %20 : vector<32x32xf32>
    %22 = vector.extract_strided_slice %9 {offsets = [0, 0], sizes = [32, 8], strides = [1, 1]} : vector<32x32xf32> to vector<32x8xf32>
    %23 = vector.extract_strided_slice %15 {offsets = [0, 0], sizes = [32, 8], strides = [1, 1]} : vector<32x32xf32> to vector<32x8xf32>
    %24 = vector.extract_strided_slice %21 {offsets = [0, 0], sizes = [32, 8], strides = [1, 1]} : vector<32x32xf32> to vector<32x8xf32>
    %cst_16 = arith.constant dense<0.000000e+00> : vector<32x32xf32>
    %25 = tpu.matmul %22, %23, %cst_16 {dimension_numbers = #tpu.dot_dimension_numbers<[1], [1], [0], [0], [0, 0, 1, 0], [], []>} : vector<32x8xf32>, vector<32x8xf32>, vector<32x32xf32> -> vector<32x32xf32>
    %cst_17 = arith.constant 0.353553385 : f32
    %26 = vector.broadcast %cst_17 : f32 to vector<32x32xf32>
    %27 = arith.mulf %25, %26 : vector<32x32xf32>
    %c0_18 = arith.constant 0 : index
    %c0_19 = arith.constant 0 : index
    %c0_20 = arith.constant 0 : index
    %28 = vector.load %arg4[%c0_18, %c0_19, %c0_20] : memref<4x32x32xf32, #tpu.memory_space<vmem>>, vector<1x32x32xf32>
    %29 = vector.shape_cast %28 : vector<1x32x32xf32> to vector<32x32xf32>
    %30 = arith.addf %27, %29 : vector<32x32xf32>
    %cst_21 = arith.constant dense<0xFF800000> : vector<32xf32>
    %31 = vector.multi_reduction <maximumf>, %30, %cst_21 [1] : vector<32x32xf32> to vector<32xf32>
    %32 = vector.shape_cast %31 : vector<32xf32> to vector<32x1xf32>
    %33 = vector.broadcast %32 : vector<32x1xf32> to vector<32x32xf32>
    %34 = arith.subf %30, %33 : vector<32x32xf32>
    %35 = math.exp %34 : vector<32x32xf32>
    %cst_22 = arith.constant dense<0.000000e+00> : vector<32xf32>
    %36 = vector.multi_reduction <add>, %35, %cst_22 [1] : vector<32x32xf32> to vector<32xf32>
    %37 = vector.shape_cast %36 : vector<32xf32> to vector<32x1xf32>
    %38 = tpu.reciprocal %37 {approx = true} : vector<32x1xf32> -> vector<32x1xf32>
    %39 = vector.broadcast %38 : vector<32x1xf32> to vector<32x32xf32>
    %40 = arith.mulf %35, %39 : vector<32x32xf32>
    %cst_23 = arith.constant dense<0.000000e+00> : vector<32x8xf32>
    %41 = tpu.matmul %40, %24, %cst_23 {dimension_numbers = #tpu.dot_dimension_numbers<[1], [0], [0], [1], [0, 0, 1, 1], [], []>} : vector<32x32xf32>, vector<32x8xf32>, vector<32x8xf32> -> vector<32x8xf32>
    %42 = vector.extract_strided_slice %9 {offsets = [0, 8], sizes = [32, 8], strides = [1, 1]} : vector<32x32xf32> to vector<32x8xf32>
    %43 = vector.extract_strided_slice %15 {offsets = [0, 8], sizes = [32, 8], strides = [1, 1]} : vector<32x32xf32> to vector<32x8xf32>
    %44 = vector.extract_strided_slice %21 {offsets = [0, 8], sizes = [32, 8], strides = [1, 1]} : vector<32x32xf32> to vector<32x8xf32>
    %cst_24 = arith.constant dense<0.000000e+00> : vector<32x32xf32>
    %45 = tpu.matmul %42, %43, %cst_24 {dimension_numbers = #tpu.dot_dimension_numbers<[1], [1], [0], [0], [0, 0, 1, 0], [], []>} : vector<32x8xf32>, vector<32x8xf32>, vector<32x32xf32> -> vector<32x32xf32>
    %cst_25 = arith.constant 0.353553385 : f32
    %46 = vector.broadcast %cst_25 : f32 to vector<32x32xf32>
    %47 = arith.mulf %45, %46 : vector<32x32xf32>
    %c1_26 = arith.constant 1 : index
    %c0_27 = arith.constant 0 : index
    %c0_28 = arith.constant 0 : index
    %48 = vector.load %arg4[%c1_26, %c0_27, %c0_28] : memref<4x32x32xf32, #tpu.memory_space<vmem>>, vector<1x32x32xf32>
    %49 = vector.shape_cast %48 : vector<1x32x32xf32> to vector<32x32xf32>
    %50 = arith.addf %47, %49 : vector<32x32xf32>
    %cst_29 = arith.constant dense<0xFF800000> : vector<32xf32>
    %51 = vector.multi_reduction <maximumf>, %50, %cst_29 [1] : vector<32x32xf32> to vector<32xf32>
    %52 = vector.shape_cast %51 : vector<32xf32> to vector<32x1xf32>
    %53 = vector.broadcast %52 : vector<32x1xf32> to vector<32x32xf32>
    %54 = arith.subf %50, %53 : vector<32x32xf32>
    %55 = math.exp %54 : vector<32x32xf32>
    %cst_30 = arith.constant dense<0.000000e+00> : vector<32xf32>
    %56 = vector.multi_reduction <add>, %55, %cst_30 [1] : vector<32x32xf32> to vector<32xf32>
    %57 = vector.shape_cast %56 : vector<32xf32> to vector<32x1xf32>
    %58 = tpu.reciprocal %57 {approx = true} : vector<32x1xf32> -> vector<32x1xf32>
    %59 = vector.broadcast %58 : vector<32x1xf32> to vector<32x32xf32>
    %60 = arith.mulf %55, %59 : vector<32x32xf32>
    %cst_31 = arith.constant dense<0.000000e+00> : vector<32x8xf32>
    %61 = tpu.matmul %60, %44, %cst_31 {dimension_numbers = #tpu.dot_dimension_numbers<[1], [0], [0], [1], [0, 0, 1, 1], [], []>} : vector<32x32xf32>, vector<32x8xf32>, vector<32x8xf32> -> vector<32x8xf32>
    %62 = vector.extract_strided_slice %9 {offsets = [0, 16], sizes = [32, 8], strides = [1, 1]} : vector<32x32xf32> to vector<32x8xf32>
    %63 = vector.extract_strided_slice %15 {offsets = [0, 16], sizes = [32, 8], strides = [1, 1]} : vector<32x32xf32> to vector<32x8xf32>
    %64 = vector.extract_strided_slice %21 {offsets = [0, 16], sizes = [32, 8], strides = [1, 1]} : vector<32x32xf32> to vector<32x8xf32>
    %cst_32 = arith.constant dense<0.000000e+00> : vector<32x32xf32>
    %65 = tpu.matmul %62, %63, %cst_32 {dimension_numbers = #tpu.dot_dimension_numbers<[1], [1], [0], [0], [0, 0, 1, 0], [], []>} : vector<32x8xf32>, vector<32x8xf32>, vector<32x32xf32> -> vector<32x32xf32>
    %cst_33 = arith.constant 0.353553385 : f32
    %66 = vector.broadcast %cst_33 : f32 to vector<32x32xf32>
    %67 = arith.mulf %65, %66 : vector<32x32xf32>
    %c2_34 = arith.constant 2 : index
    %c0_35 = arith.constant 0 : index
    %c0_36 = arith.constant 0 : index
    %68 = vector.load %arg4[%c2_34, %c0_35, %c0_36] : memref<4x32x32xf32, #tpu.memory_space<vmem>>, vector<1x32x32xf32>
    %69 = vector.shape_cast %68 : vector<1x32x32xf32> to vector<32x32xf32>
    %70 = arith.addf %67, %69 : vector<32x32xf32>
    %cst_37 = arith.constant dense<0xFF800000> : vector<32xf32>
    %71 = vector.multi_reduction <maximumf>, %70, %cst_37 [1] : vector<32x32xf32> to vector<32xf32>
    %72 = vector.shape_cast %71 : vector<32xf32> to vector<32x1xf32>
    %73 = vector.broadcast %72 : vector<32x1xf32> to vector<32x32xf32>
    %74 = arith.subf %70, %73 : vector<32x32xf32>
    %75 = math.exp %74 : vector<32x32xf32>
    %cst_38 = arith.constant dense<0.000000e+00> : vector<32xf32>
    %76 = vector.multi_reduction <add>, %75, %cst_38 [1] : vector<32x32xf32> to vector<32xf32>
    %77 = vector.shape_cast %76 : vector<32xf32> to vector<32x1xf32>
    %78 = tpu.reciprocal %77 {approx = true} : vector<32x1xf32> -> vector<32x1xf32>
    %79 = vector.broadcast %78 : vector<32x1xf32> to vector<32x32xf32>
    %80 = arith.mulf %75, %79 : vector<32x32xf32>
    %cst_39 = arith.constant dense<0.000000e+00> : vector<32x8xf32>
    %81 = tpu.matmul %80, %64, %cst_39 {dimension_numbers = #tpu.dot_dimension_numbers<[1], [0], [0], [1], [0, 0, 1, 1], [], []>} : vector<32x32xf32>, vector<32x8xf32>, vector<32x8xf32> -> vector<32x8xf32>
    %82 = vector.extract_strided_slice %9 {offsets = [0, 24], sizes = [32, 8], strides = [1, 1]} : vector<32x32xf32> to vector<32x8xf32>
    %83 = vector.extract_strided_slice %15 {offsets = [0, 24], sizes = [32, 8], strides = [1, 1]} : vector<32x32xf32> to vector<32x8xf32>
    %84 = vector.extract_strided_slice %21 {offsets = [0, 24], sizes = [32, 8], strides = [1, 1]} : vector<32x32xf32> to vector<32x8xf32>
    %cst_40 = arith.constant dense<0.000000e+00> : vector<32x32xf32>
    %85 = tpu.matmul %82, %83, %cst_40 {dimension_numbers = #tpu.dot_dimension_numbers<[1], [1], [0], [0], [0, 0, 1, 0], [], []>} : vector<32x8xf32>, vector<32x8xf32>, vector<32x32xf32> -> vector<32x32xf32>
    %cst_41 = arith.constant 0.353553385 : f32
    %86 = vector.broadcast %cst_41 : f32 to vector<32x32xf32>
    %87 = arith.mulf %85, %86 : vector<32x32xf32>
    %c3 = arith.constant 3 : index
    %c0_42 = arith.constant 0 : index
    %c0_43 = arith.constant 0 : index
    %88 = vector.load %arg4[%c3, %c0_42, %c0_43] : memref<4x32x32xf32, #tpu.memory_space<vmem>>, vector<1x32x32xf32>
    %89 = vector.shape_cast %88 : vector<1x32x32xf32> to vector<32x32xf32>
    %90 = arith.addf %87, %89 : vector<32x32xf32>
    %cst_44 = arith.constant dense<0xFF800000> : vector<32xf32>
    %91 = vector.multi_reduction <maximumf>, %90, %cst_44 [1] : vector<32x32xf32> to vector<32xf32>
    %92 = vector.shape_cast %91 : vector<32xf32> to vector<32x1xf32>
    %93 = vector.broadcast %92 : vector<32x1xf32> to vector<32x32xf32>
    %94 = arith.subf %90, %93 : vector<32x32xf32>
    %95 = math.exp %94 : vector<32x32xf32>
    %cst_45 = arith.constant dense<0.000000e+00> : vector<32xf32>
    %96 = vector.multi_reduction <add>, %95, %cst_45 [1] : vector<32x32xf32> to vector<32xf32>
    %97 = vector.shape_cast %96 : vector<32xf32> to vector<32x1xf32>
    %98 = tpu.reciprocal %97 {approx = true} : vector<32x1xf32> -> vector<32x1xf32>
    %99 = vector.broadcast %98 : vector<32x1xf32> to vector<32x32xf32>
    %100 = arith.mulf %95, %99 : vector<32x32xf32>
    %cst_46 = arith.constant dense<0.000000e+00> : vector<32x8xf32>
    %101 = tpu.matmul %100, %84, %cst_46 {dimension_numbers = #tpu.dot_dimension_numbers<[1], [0], [0], [1], [0, 0, 1, 1], [], []>} : vector<32x32xf32>, vector<32x8xf32>, vector<32x8xf32> -> vector<32x8xf32>
    %102 = tpu.concatenate %41, %61, %81, %101 in 1 : vector<32x8xf32>, vector<32x8xf32>, vector<32x8xf32>, vector<32x8xf32> -> vector<32x32xf32>
    %c3_47 = arith.constant 3 : index
    %c0_48 = arith.constant 0 : index
    %c0_49 = arith.constant 0 : index
    %103 = vector.load %arg5[%c3_47, %c0_48, %c0_49] : memref<5x32x32xf32, #tpu.memory_space<vmem>>, vector<1x32x32xf32>
    %104 = vector.shape_cast %103 : vector<1x32x32xf32> to vector<32x32xf32>
    %cst_50 = arith.constant dense<0.000000e+00> : vector<32x32xf32>
    %105 = tpu.matmul %102, %104, %cst_50 {dimension_numbers = #tpu.dot_dimension_numbers<[1], [0], [0], [1], [0, 0, 1, 1], [], []>} : vector<32x32xf32>, vector<32x32xf32>, vector<32x32xf32> -> vector<32x32xf32>
    %106 = vector.extract_strided_slice %3 {offsets = [3, 0], sizes = [1, 32], strides = [1, 1]} : vector<22x32xf32> to vector<1x32xf32>
    %107 = vector.broadcast %106 : vector<1x32xf32> to vector<32x32xf32>
    %108 = arith.addf %105, %107 : vector<32x32xf32>
    %109 = arith.addf %0, %108 : vector<32x32xf32>
    %110 = vector.extract_strided_slice %3 {offsets = [4, 0], sizes = [1, 32], strides = [1, 1]} : vector<22x32xf32> to vector<1x32xf32>
    %111 = vector.extract_strided_slice %3 {offsets = [5, 0], sizes = [1, 32], strides = [1, 1]} : vector<22x32xf32> to vector<1x32xf32>
    %cst_51 = arith.constant dense<0.000000e+00> : vector<32xf32>
    %112 = vector.multi_reduction <add>, %109, %cst_51 [1] : vector<32x32xf32> to vector<32xf32>
    %113 = vector.shape_cast %112 : vector<32xf32> to vector<32x1xf32>
    %cst_52 = arith.constant 3.200000e+01 : f32
    %114 = vector.broadcast %cst_52 : f32 to vector<32x1xf32>
    %115 = arith.divf %113, %114 : vector<32x1xf32>
    %116 = vector.broadcast %115 : vector<32x1xf32> to vector<32x32xf32>
    %117 = arith.subf %109, %116 : vector<32x32xf32>
    %118 = arith.mulf %117, %117 : vector<32x32xf32>
    %cst_53 = arith.constant dense<0.000000e+00> : vector<32xf32>
    %119 = vector.multi_reduction <add>, %118, %cst_53 [1] : vector<32x32xf32> to vector<32xf32>
    %120 = vector.shape_cast %119 : vector<32xf32> to vector<32x1xf32>
    %cst_54 = arith.constant 3.200000e+01 : f32
    %121 = vector.broadcast %cst_54 : f32 to vector<32x1xf32>
    %122 = arith.divf %120, %121 : vector<32x1xf32>
    %123 = vector.broadcast %115 : vector<32x1xf32> to vector<32x32xf32>
    %124 = arith.subf %109, %123 : vector<32x32xf32>
    %cst_55 = arith.constant 9.99999974E-6 : f32
    %125 = vector.broadcast %cst_55 : f32 to vector<32x1xf32>
    %126 = arith.addf %122, %125 : vector<32x1xf32>
    %127 = math.rsqrt %126 : vector<32x1xf32>
    %128 = vector.broadcast %127 : vector<32x1xf32> to vector<32x32xf32>
    %129 = arith.mulf %124, %128 : vector<32x32xf32>
    %130 = vector.broadcast %110 : vector<1x32xf32> to vector<32x32xf32>
    %131 = arith.mulf %129, %130 : vector<32x32xf32>
    %132 = vector.broadcast %111 : vector<1x32xf32> to vector<32x32xf32>
    %133 = arith.addf %131, %132 : vector<32x32xf32>
    %c0_56 = arith.constant 0 : index
    %c0_57 = arith.constant 0 : index
    %134 = vector.load %arg8[%c0_56, %c0_57] : memref<32x9xf32, #tpu.memory_space<vmem>>, vector<32x9xf32>
    %135 = vector.extract_strided_slice %3 {offsets = [17, 0], sizes = [1, 32], strides = [1, 1]} : vector<22x32xf32> to vector<1x32xf32>
    %136 = vector.broadcast %135 : vector<1x32xf32> to vector<32x32xf32>
    %137 = arith.mulf %133, %136 : vector<32x32xf32>
    %c5_i32 = arith.constant 5 : i32
    %138 = tpu.dynamic_rotate %133 by %c5_i32 dim 0 : vector<32x32xf32>, i32 -> vector<32x32xf32>
    %139 = vector.extract_strided_slice %134 {offsets = [0, 0], sizes = [32, 1], strides = [1, 1]} : vector<32x9xf32> to vector<32x1xf32>
    %140 = vector.broadcast %139 : vector<32x1xf32> to vector<32x32xf32>
    %141 = arith.mulf %138, %140 : vector<32x32xf32>
    %142 = vector.extract_strided_slice %3 {offsets = [13, 0], sizes = [1, 32], strides = [1, 1]} : vector<22x32xf32> to vector<1x32xf32>
    %143 = vector.broadcast %142 : vector<1x32xf32> to vector<32x32xf32>
    %144 = arith.mulf %141, %143 : vector<32x32xf32>
    %145 = arith.addf %137, %144 : vector<32x32xf32>
    %c4_i32 = arith.constant 4 : i32
    %146 = tpu.dynamic_rotate %133 by %c4_i32 dim 0 : vector<32x32xf32>, i32 -> vector<32x32xf32>
    %147 = vector.extract_strided_slice %134 {offsets = [0, 1], sizes = [32, 1], strides = [1, 1]} : vector<32x9xf32> to vector<32x1xf32>
    %148 = vector.broadcast %147 : vector<32x1xf32> to vector<32x32xf32>
    %149 = arith.mulf %146, %148 : vector<32x32xf32>
    %150 = vector.extract_strided_slice %3 {offsets = [14, 0], sizes = [1, 32], strides = [1, 1]} : vector<22x32xf32> to vector<1x32xf32>
    %151 = vector.broadcast %150 : vector<1x32xf32> to vector<32x32xf32>
    %152 = arith.mulf %149, %151 : vector<32x32xf32>
    %153 = arith.addf %145, %152 : vector<32x32xf32>
    %c3_i32 = arith.constant 3 : i32
    %154 = tpu.dynamic_rotate %133 by %c3_i32 dim 0 : vector<32x32xf32>, i32 -> vector<32x32xf32>
    %155 = vector.extract_strided_slice %134 {offsets = [0, 2], sizes = [32, 1], strides = [1, 1]} : vector<32x9xf32> to vector<32x1xf32>
    %156 = vector.broadcast %155 : vector<32x1xf32> to vector<32x32xf32>
    %157 = arith.mulf %154, %156 : vector<32x32xf32>
    %158 = vector.extract_strided_slice %3 {offsets = [15, 0], sizes = [1, 32], strides = [1, 1]} : vector<22x32xf32> to vector<1x32xf32>
    %159 = vector.broadcast %158 : vector<1x32xf32> to vector<32x32xf32>
    %160 = arith.mulf %157, %159 : vector<32x32xf32>
    %161 = arith.addf %153, %160 : vector<32x32xf32>
    %c1_i32 = arith.constant 1 : i32
    %162 = tpu.dynamic_rotate %133 by %c1_i32 dim 0 : vector<32x32xf32>, i32 -> vector<32x32xf32>
    %163 = vector.extract_strided_slice %134 {offsets = [0, 3], sizes = [32, 1], strides = [1, 1]} : vector<32x9xf32> to vector<32x1xf32>
    %164 = vector.broadcast %163 : vector<32x1xf32> to vector<32x32xf32>
    %165 = arith.mulf %162, %164 : vector<32x32xf32>
    %166 = vector.extract_strided_slice %3 {offsets = [16, 0], sizes = [1, 32], strides = [1, 1]} : vector<22x32xf32> to vector<1x32xf32>
    %167 = vector.broadcast %166 : vector<1x32xf32> to vector<32x32xf32>
    %168 = arith.mulf %165, %167 : vector<32x32xf32>
    %169 = arith.addf %161, %168 : vector<32x32xf32>
    %c31_i32 = arith.constant 31 : i32
    %170 = tpu.dynamic_rotate %133 by %c31_i32 dim 0 : vector<32x32xf32>, i32 -> vector<32x32xf32>
    %171 = vector.extract_strided_slice %134 {offsets = [0, 5], sizes = [32, 1], strides = [1, 1]} : vector<32x9xf32> to vector<32x1xf32>
    %172 = vector.broadcast %171 : vector<32x1xf32> to vector<32x32xf32>
    %173 = arith.mulf %170, %172 : vector<32x32xf32>
    %174 = vector.extract_strided_slice %3 {offsets = [18, 0], sizes = [1, 32], strides = [1, 1]} : vector<22x32xf32> to vector<1x32xf32>
    %175 = vector.broadcast %174 : vector<1x32xf32> to vector<32x32xf32>
    %176 = arith.mulf %173, %175 : vector<32x32xf32>
    %177 = arith.addf %169, %176 : vector<32x32xf32>
    %c29_i32 = arith.constant 29 : i32
    %178 = tpu.dynamic_rotate %133 by %c29_i32 dim 0 : vector<32x32xf32>, i32 -> vector<32x32xf32>
    %179 = vector.extract_strided_slice %134 {offsets = [0, 6], sizes = [32, 1], strides = [1, 1]} : vector<32x9xf32> to vector<32x1xf32>
    %180 = vector.broadcast %179 : vector<32x1xf32> to vector<32x32xf32>
    %181 = arith.mulf %178, %180 : vector<32x32xf32>
    %182 = vector.extract_strided_slice %3 {offsets = [19, 0], sizes = [1, 32], strides = [1, 1]} : vector<22x32xf32> to vector<1x32xf32>
    %183 = vector.broadcast %182 : vector<1x32xf32> to vector<32x32xf32>
    %184 = arith.mulf %181, %183 : vector<32x32xf32>
    %185 = arith.addf %177, %184 : vector<32x32xf32>
    %c28_i32 = arith.constant 28 : i32
    %186 = tpu.dynamic_rotate %133 by %c28_i32 dim 0 : vector<32x32xf32>, i32 -> vector<32x32xf32>
    %187 = vector.extract_strided_slice %134 {offsets = [0, 7], sizes = [32, 1], strides = [1, 1]} : vector<32x9xf32> to vector<32x1xf32>
    %188 = vector.broadcast %187 : vector<32x1xf32> to vector<32x32xf32>
    %189 = arith.mulf %186, %188 : vector<32x32xf32>
    %190 = vector.extract_strided_slice %3 {offsets = [20, 0], sizes = [1, 32], strides = [1, 1]} : vector<22x32xf32> to vector<1x32xf32>
    %191 = vector.broadcast %190 : vector<1x32xf32> to vector<32x32xf32>
    %192 = arith.mulf %189, %191 : vector<32x32xf32>
    %193 = arith.addf %185, %192 : vector<32x32xf32>
    %c27_i32 = arith.constant 27 : i32
    %194 = tpu.dynamic_rotate %133 by %c27_i32 dim 0 : vector<32x32xf32>, i32 -> vector<32x32xf32>
    %195 = vector.extract_strided_slice %134 {offsets = [0, 8], sizes = [32, 1], strides = [1, 1]} : vector<32x9xf32> to vector<32x1xf32>
    %196 = vector.broadcast %195 : vector<32x1xf32> to vector<32x32xf32>
    %197 = arith.mulf %194, %196 : vector<32x32xf32>
    %198 = vector.extract_strided_slice %3 {offsets = [21, 0], sizes = [1, 32], strides = [1, 1]} : vector<22x32xf32> to vector<1x32xf32>
    %199 = vector.broadcast %198 : vector<1x32xf32> to vector<32x32xf32>
    %200 = arith.mulf %197, %199 : vector<32x32xf32>
    %201 = arith.addf %193, %200 : vector<32x32xf32>
    %202 = vector.extract_strided_slice %3 {offsets = [6, 0], sizes = [1, 32], strides = [1, 1]} : vector<22x32xf32> to vector<1x32xf32>
    %203 = vector.broadcast %202 : vector<1x32xf32> to vector<32x32xf32>
    %204 = arith.addf %201, %203 : vector<32x32xf32>
    %205 = arith.mulf %204, %204 : vector<32x32xf32>
    %cst_58 = arith.constant 5.000000e-01 : f32
    %206 = vector.broadcast %cst_58 : f32 to vector<32x32xf32>
    %207 = arith.mulf %206, %204 : vector<32x32xf32>
    %cst_59 = arith.constant 0.797884583 : f32
    %208 = vector.broadcast %cst_59 : f32 to vector<32x32xf32>
    %209 = arith.mulf %208, %204 : vector<32x32xf32>
    %cst_60 = arith.constant 4.471500e-02 : f32
    %210 = vector.broadcast %cst_60 : f32 to vector<32x32xf32>
    %211 = arith.mulf %210, %205 : vector<32x32xf32>
    %cst_61 = arith.constant 1.000000e+00 : f32
    %212 = vector.broadcast %cst_61 : f32 to vector<32x32xf32>
    %213 = arith.addf %212, %211 : vector<32x32xf32>
    %214 = arith.mulf %209, %213 : vector<32x32xf32>
    %215 = math.tanh %214 : vector<32x32xf32>
    %cst_62 = arith.constant 1.000000e+00 : f32
    %216 = vector.broadcast %cst_62 : f32 to vector<32x32xf32>
    %217 = arith.addf %216, %215 : vector<32x32xf32>
    %218 = arith.mulf %207, %217 : vector<32x32xf32>
    %c4 = arith.constant 4 : index
    %c0_63 = arith.constant 0 : index
    %c0_64 = arith.constant 0 : index
    %219 = vector.load %arg5[%c4, %c0_63, %c0_64] : memref<5x32x32xf32, #tpu.memory_space<vmem>>, vector<1x32x32xf32>
    %220 = vector.shape_cast %219 : vector<1x32x32xf32> to vector<32x32xf32>
    %cst_65 = arith.constant dense<0.000000e+00> : vector<32x32xf32>
    %221 = tpu.matmul %218, %220, %cst_65 {dimension_numbers = #tpu.dot_dimension_numbers<[1], [0], [0], [1], [0, 0, 1, 1], [], []>} : vector<32x32xf32>, vector<32x32xf32>, vector<32x32xf32> -> vector<32x32xf32>
    %222 = vector.extract_strided_slice %3 {offsets = [7, 0], sizes = [1, 32], strides = [1, 1]} : vector<22x32xf32> to vector<1x32xf32>
    %223 = vector.broadcast %222 : vector<1x32xf32> to vector<32x32xf32>
    %224 = arith.addf %221, %223 : vector<32x32xf32>
    %225 = arith.addf %133, %224 : vector<32x32xf32>
    %226 = vector.extract_strided_slice %3 {offsets = [8, 0], sizes = [1, 32], strides = [1, 1]} : vector<22x32xf32> to vector<1x32xf32>
    %227 = vector.extract_strided_slice %3 {offsets = [9, 0], sizes = [1, 32], strides = [1, 1]} : vector<22x32xf32> to vector<1x32xf32>
    %cst_66 = arith.constant dense<0.000000e+00> : vector<32xf32>
    %228 = vector.multi_reduction <add>, %225, %cst_66 [1] : vector<32x32xf32> to vector<32xf32>
    %229 = vector.shape_cast %228 : vector<32xf32> to vector<32x1xf32>
    %cst_67 = arith.constant 3.200000e+01 : f32
    %230 = vector.broadcast %cst_67 : f32 to vector<32x1xf32>
    %231 = arith.divf %229, %230 : vector<32x1xf32>
    %232 = vector.broadcast %231 : vector<32x1xf32> to vector<32x32xf32>
    %233 = arith.subf %225, %232 : vector<32x32xf32>
    %234 = arith.mulf %233, %233 : vector<32x32xf32>
    %cst_68 = arith.constant dense<0.000000e+00> : vector<32xf32>
    %235 = vector.multi_reduction <add>, %234, %cst_68 [1] : vector<32x32xf32> to vector<32xf32>
    %236 = vector.shape_cast %235 : vector<32xf32> to vector<32x1xf32>
    %cst_69 = arith.constant 3.200000e+01 : f32
    %237 = vector.broadcast %cst_69 : f32 to vector<32x1xf32>
    %238 = arith.divf %236, %237 : vector<32x1xf32>
    %239 = vector.broadcast %231 : vector<32x1xf32> to vector<32x32xf32>
    %240 = arith.subf %225, %239 : vector<32x32xf32>
    %cst_70 = arith.constant 9.99999974E-6 : f32
    %241 = vector.broadcast %cst_70 : f32 to vector<32x1xf32>
    %242 = arith.addf %238, %241 : vector<32x1xf32>
    %243 = math.rsqrt %242 : vector<32x1xf32>
    %244 = vector.broadcast %243 : vector<32x1xf32> to vector<32x32xf32>
    %245 = arith.mulf %240, %244 : vector<32x32xf32>
    %246 = vector.broadcast %226 : vector<1x32xf32> to vector<32x32xf32>
    %247 = arith.mulf %245, %246 : vector<32x32xf32>
    %248 = vector.broadcast %227 : vector<1x32xf32> to vector<32x32xf32>
    %249 = arith.addf %247, %248 : vector<32x32xf32>
    %c0_71 = arith.constant 0 : index
    %c0_72 = arith.constant 0 : index
    %250 = vector.load %arg6[%c0_71, %c0_72] : memref<97x64xf32, #tpu.memory_space<vmem>>, vector<32x64xf32>
    %c32 = arith.constant 32 : index
    %c0_73 = arith.constant 0 : index
    %251 = vector.load %arg6[%c32, %c0_73] : memref<97x64xf32, #tpu.memory_space<vmem>>, vector<64x32xf32>
    %c96 = arith.constant 96 : index
    %c0_74 = arith.constant 0 : index
    %252 = vector.load %arg6[%c96, %c0_74] : memref<97x64xf32, #tpu.memory_space<vmem>>, vector<1x64xf32>
    %cst_75 = arith.constant dense<0.000000e+00> : vector<32x64xf32>
    %253 = tpu.matmul %249, %250, %cst_75 {dimension_numbers = #tpu.dot_dimension_numbers<[1], [0], [0], [1], [0, 0, 1, 1], [], []>} : vector<32x32xf32>, vector<32x64xf32>, vector<32x64xf32> -> vector<32x64xf32>
    %254 = vector.broadcast %252 : vector<1x64xf32> to vector<32x64xf32>
    %255 = arith.addf %253, %254 : vector<32x64xf32>
    %cst_76 = arith.constant 0.000000e+00 : f32
    %256 = vector.broadcast %cst_76 : f32 to vector<32x64xf32>
    %257 = arith.maximumf %255, %256 : vector<32x64xf32>
    %cst_77 = arith.constant dense<0.000000e+00> : vector<32x32xf32>
    %258 = tpu.matmul %257, %251, %cst_77 {dimension_numbers = #tpu.dot_dimension_numbers<[1], [0], [0], [1], [0, 0, 1, 1], [], []>} : vector<32x64xf32>, vector<64x32xf32>, vector<32x32xf32> -> vector<32x32xf32>
    %259 = vector.extract_strided_slice %3 {offsets = [10, 0], sizes = [1, 32], strides = [1, 1]} : vector<22x32xf32> to vector<1x32xf32>
    %260 = vector.broadcast %259 : vector<1x32xf32> to vector<32x32xf32>
    %261 = arith.addf %258, %260 : vector<32x32xf32>
    %262 = arith.addf %249, %261 : vector<32x32xf32>
    %263 = vector.extract_strided_slice %3 {offsets = [11, 0], sizes = [1, 32], strides = [1, 1]} : vector<22x32xf32> to vector<1x32xf32>
    %264 = vector.extract_strided_slice %3 {offsets = [12, 0], sizes = [1, 32], strides = [1, 1]} : vector<22x32xf32> to vector<1x32xf32>
    %cst_78 = arith.constant dense<0.000000e+00> : vector<32xf32>
    %265 = vector.multi_reduction <add>, %262, %cst_78 [1] : vector<32x32xf32> to vector<32xf32>
    %266 = vector.shape_cast %265 : vector<32xf32> to vector<32x1xf32>
    %cst_79 = arith.constant 3.200000e+01 : f32
    %267 = vector.broadcast %cst_79 : f32 to vector<32x1xf32>
    %268 = arith.divf %266, %267 : vector<32x1xf32>
    %269 = vector.broadcast %268 : vector<32x1xf32> to vector<32x32xf32>
    %270 = arith.subf %262, %269 : vector<32x32xf32>
    %271 = arith.mulf %270, %270 : vector<32x32xf32>
    %cst_80 = arith.constant dense<0.000000e+00> : vector<32xf32>
    %272 = vector.multi_reduction <add>, %271, %cst_80 [1] : vector<32x32xf32> to vector<32xf32>
    %273 = vector.shape_cast %272 : vector<32xf32> to vector<32x1xf32>
    %cst_81 = arith.constant 3.200000e+01 : f32
    %274 = vector.broadcast %cst_81 : f32 to vector<32x1xf32>
    %275 = arith.divf %273, %274 : vector<32x1xf32>
    %276 = vector.broadcast %268 : vector<32x1xf32> to vector<32x32xf32>
    %277 = arith.subf %262, %276 : vector<32x32xf32>
    %cst_82 = arith.constant 9.99999974E-6 : f32
    %278 = vector.broadcast %cst_82 : f32 to vector<32x1xf32>
    %279 = arith.addf %275, %278 : vector<32x1xf32>
    %280 = math.rsqrt %279 : vector<32x1xf32>
    %281 = vector.broadcast %280 : vector<32x1xf32> to vector<32x32xf32>
    %282 = arith.mulf %277, %281 : vector<32x32xf32>
    %283 = vector.broadcast %263 : vector<1x32xf32> to vector<32x32xf32>
    %284 = arith.mulf %282, %283 : vector<32x32xf32>
    %285 = vector.broadcast %264 : vector<1x32xf32> to vector<32x32xf32>
    %286 = arith.addf %284, %285 : vector<32x32xf32>
    %c0_83 = arith.constant 0 : index
    %c0_84 = arith.constant 0 : index
    %287 = vector.load %arg9[%c0_83, %c0_84] : memref<32x32xf32, #tpu.memory_space<vmem>>, vector<32x32xf32>
    tpu.vector_store %arg9[%c0_83, %c0_84], %286 {strides = array<i32>} : memref<32x32xf32, #tpu.memory_space<vmem>>, vector<32x32xf32>,
    return
  }
  func.func @transform_0(%arg0: i32) -> (i32, i32) {
    %c0_i32 = arith.constant 0 : i32
    %c0_i32_0 = arith.constant 0 : i32
    %c0_i32_1 = arith.constant 0 : i32
    return %c0_i32, %c0_i32_0 : i32, i32
  }
  func.func @transform_1(%arg0: i32) -> (i32, i32) {
    %c0_i32 = arith.constant 0 : i32
    %c0_i32_0 = arith.constant 0 : i32
    %c0_i32_1 = arith.constant 0 : i32
    return %c0_i32, %c0_i32_0 : i32, i32
  }
  func.func @transform_2(%arg0: i32) -> (i32, i32) {
    %c0_i32 = arith.constant 0 : i32
    %c0_i32_0 = arith.constant 0 : i32
    %c0_i32_1 = arith.constant 0 : i32
    return %c0_i32, %c0_i32_0 : i32, i32
  }
  func.func @transform_3(%arg0: i32) -> (i32, i32, i32) {
    %c0_i32 = arith.constant 0 : i32
    %c0_i32_0 = arith.constant 0 : i32
    %c0_i32_1 = arith.constant 0 : i32
    %c0_i32_2 = arith.constant 0 : i32
    return %c0_i32, %c0_i32_0, %c0_i32_1 : i32, i32, i32
  }
  func.func @transform_4(%arg0: i32) -> (i32, i32, i32) {
    %c0_i32 = arith.constant 0 : i32
    %c0_i32_0 = arith.constant 0 : i32
    %c0_i32_1 = arith.constant 0 : i32
    %c0_i32_2 = arith.constant 0 : i32
    return %c0_i32, %c0_i32_0, %c0_i32_1 : i32, i32, i32
  }
  func.func @transform_5(%arg0: i32) -> (i32, i32) {
    %c0_i32 = arith.constant 0 : i32
    %c0_i32_0 = arith.constant 0 : i32
    %c0_i32_1 = arith.constant 0 : i32
    return %c0_i32, %c0_i32_0 : i32, i32
  }
  func.func @transform_6(%arg0: i32) -> (i32, i32) {
    %c0_i32 = arith.constant 0 : i32
    %c0_i32_0 = arith.constant 0 : i32
    %c0_i32_1 = arith.constant 0 : i32
    return %c0_i32, %c0_i32_0 : i32, i32
  }
  func.func @transform_7(%arg0: i32) -> (i32, i32) {
    %c0_i32 = arith.constant 0 : i32
    %c0_i32_0 = arith.constant 0 : i32
    %c0_i32_1 = arith.constant 0 : i32
    return %c0_i32, %c0_i32_0 : i32, i32
  }
  func.func @transform_8(%arg0: i32) -> (i32, i32) {
    %c0_i32 = arith.constant 0 : i32
    %c0_i32_0 = arith.constant 0 : i32
    %c0_i32_1 = arith.constant 0 : i32
    return %c0_i32, %c0_i32_0 : i32, i32
  }
}

</mosaic_0001>

<llo_original>
// kernel: tpu_custom_call.1
$region0: #{tpu_custom_call.1}
  #allocation0 [shape = 'u32[]', space=smem, size = 0x4, offset = 0x4, fixed_abs, tag = 'smem constant byte address 0x4 - core index']
  #allocation1 [shape = 'u32[72,128]{1,0:T(1,128)}', space=vmem, size = 0x9000, scoped, tag = 'internal scratch']
  %s0 = inlined_call_operand.vmem [shape: f32[32,32], index: 0, kind: input, shape index: {}]
  %s1 = inlined_call_operand.hbm [shape: f32[32,32], index: 1, kind: input, shape index: {}]
  %s2 = inlined_call_operand.hbm [shape: f32[32,32], index: 2, kind: input, shape index: {}]
  %s3 = inlined_call_operand.hbm [shape: f32[4,32,32], index: 3, kind: input, shape index: {}]
  %s4 = inlined_call_operand.vmem [shape: f32[5,32,32], index: 4, kind: input, shape index: {}]
  %s5 = inlined_call_operand.vmem [shape: f32[97,64], index: 5, kind: input, shape index: {}]
  %s6 = inlined_call_operand.vmem [shape: f32[22,32], index: 6, kind: input, shape index: {}]
  %s7 = inlined_call_operand.vmem [shape: f32[32,9], index: 7, kind: input, shape index: {}]
  %s8 = inlined_call_operand.hbm [shape: f32[32,32], index: 8, kind: output, shape index: {}]
  %s9 = sld [smem:[#allocation0]]
  $region54: #{tpu_custom_call.1} parent=0
    _
  %s11 = ssub.s32 1, %s9
  %s12 = scalar_select 0, %s11, %s9
  $region1: #{tpu_custom_call.1} parent=0
    #allocation2 [shape = 'u8[16384]{0}', space=vmem, size = 0x4000, scoped, tag = 'input window, operand 1, single buffered']
    #allocation3 [shape = 's32[1]{0}', space=sflag, size = 0x4, scoped, tag = 'scoped memory for tpu_custom_call.1']
    #allocation4 [shape = 's32[1]{0}', space=sflag, size = 0x4, scoped, tag = 'scoped memory for tpu_custom_call.1']
    #allocation5 [shape = 'u8[16384]{0}', space=vmem, size = 0x4000, scoped, tag = 'input window, operand 2, single buffered']
    #allocation6 [shape = 's32[1]{0}', space=sflag, size = 0x4, scoped, tag = 'scoped memory for tpu_custom_call.1']
    #allocation7 [shape = 'u8[65536]{0}', space=vmem, size = 0x10000, scoped, tag = 'input window, operand 3, single buffered']
    #allocation8 [shape = 'u8[16384]{0}', space=vmem, size = 0x4000, scoped, tag = 'output window, operand 0, single buffered']
    %13 = vsyncpa [#allocation3], 0
    %14 = vsyncpa [#allocation6], 0
    %15 = vsyncpa [#allocation4], 0
    // Predicated region
    $region2: #{tpu_custom_call.1} parent=1 // pred_check
      _
    $region3: #{tpu_custom_call.1} parent=1 // pred_check_branch
      %17 = sbr.rel (0) target = $region5
    $region4: #{tpu_custom_call.1} parent=1 // pred_region
      _
    $region5: #{tpu_custom_call.1} parent=1 // pred_fallthru
      _
    // Predicated region
    $region6: #{tpu_custom_call.1} parent=1 // pred_check
      _
    $region7: #{tpu_custom_call.1} parent=1 // pred_check_branch
      %19 = sbr.rel (0) target = $region9
    $region8: #{tpu_custom_call.1} parent=1 // pred_region
      %21 = vsyncadd [#allocation3], 0
      %s22 = sshll.u32 %s1, 4
      %s23 = int_to_ptr.hbm [resolvable:$true] %s22
      %s24 = sshll.u32 [#allocation2], 4
      %s25 = int_to_ptr.vmem [resolvable:$true] %s24
      %30 = dma.hbm_to_vmem [thread:$0]  %s23, 512, %s25, [#allocation3], 128, 128, 8
    $region9: #{tpu_custom_call.1} parent=1 // pred_fallthru
      _
    // Predicated region
    $region10: #{tpu_custom_call.1} parent=1 // pred_check
      _
    $region11: #{tpu_custom_call.1} parent=1 // pred_check_branch
      %32 = sbr.rel (0) target = $region13
    $region12: #{tpu_custom_call.1} parent=1 // pred_region
      %34 = vsyncadd [#allocation6], 0
      %s35 = sshll.u32 %s2, 4
      %s36 = int_to_ptr.hbm [resolvable:$true] %s35
      %s37 = sshll.u32 [#allocation5], 4
      %s38 = int_to_ptr.vmem [resolvable:$true] %s37
      %43 = dma.hbm_to_vmem [thread:$0]  %s36, 512, %s38, [#allocation6], 128, 128, 8
    $region13: #{tpu_custom_call.1} parent=1 // pred_fallthru
      _
    // Predicated region
    $region14: #{tpu_custom_call.1} parent=1 // pred_check
      _
    $region15: #{tpu_custom_call.1} parent=1 // pred_check_branch
      %45 = sbr.rel (0) target = $region17
    $region16: #{tpu_custom_call.1} parent=1 // pred_region
      %47 = vsyncadd [#allocation6], 0
      %s48 = sshll.u32 %s3, 4
      %s49 = int_to_ptr.hbm [resolvable:$true] %s48
      %s50 = sshll.u32 [#allocation7], 4
      %s51 = int_to_ptr.vmem [resolvable:$true] %s50
      %56 = dma.hbm_to_vmem [thread:$0]  %s49, 2048, %s51, [#allocation6], 128, 128, 8
    $region17: #{tpu_custom_call.1} parent=1 // pred_fallthru
      _
    // Predicated region
    $region18: #{tpu_custom_call.1} parent=1 // pred_check
      _
    $region19: #{tpu_custom_call.1} parent=1 // pred_check_branch
      %58 = sbr.rel (0) target = $region21
    $region20: #{tpu_custom_call.1} parent=1 // pred_region
      _
    $region21: #{tpu_custom_call.1} parent=1 // pred_fallthru
      _
    // Predicated region
    $region22: #{tpu_custom_call.1} parent=1 // pred_check
      _
    $region23: #{tpu_custom_call.1} parent=1 // pred_check_branch
      %60 = sbr.rel (0) target = $region25
    $region24: #{tpu_custom_call.1} parent=1 // pred_region
      _
    $region25: #{tpu_custom_call.1} parent=1 // pred_fallthru
      _
    // Predicated region
    $region26: #{tpu_custom_call.1} parent=1 // pred_check
      _
    $region27: #{tpu_custom_call.1} parent=1 // pred_check_branch
      %62 = sbr.rel (0) target = $region29
    $region28: #{tpu_custom_call.1} parent=1 // pred_region
      _
    $region29: #{tpu_custom_call.1} parent=1 // pred_fallthru
      _
    // Predicated region
    $region30: #{tpu_custom_call.1} parent=1 // pred_check
      _
    $region31: #{tpu_custom_call.1} parent=1 // pred_check_branch
      %64 = sbr.rel (0) target = $region33
    $region32: #{tpu_custom_call.1} parent=1 // pred_region
      _
    $region33: #{tpu_custom_call.1} parent=1 // pred_fallthru
      _
    // Predicated region
    $region34: #{tpu_custom_call.1} parent=1 // pred_check
      _
    $region35: #{tpu_custom_call.1} parent=1 // pred_check_branch
      %66 = sbr.rel (0) target = $region37
    $region36: #{tpu_custom_call.1} parent=1 // pred_region
      %68 = dma.done [#allocation3], 512
    $region37: #{tpu_custom_call.1} parent=1 // pred_fallthru
      _
    // Predicated region
    $region38: #{tpu_custom_call.1} parent=1 // pred_check
      _
    $region39: #{tpu_custom_call.1} parent=1 // pred_check_branch
      %70 = sbr.rel (0) target = $region41
    $region40: #{tpu_custom_call.1} parent=1 // pred_region
      %72 = dma.done [#allocation6], 512
    $region41: #{tpu_custom_call.1} parent=1 // pred_fallthru
      _
    // Predicated region
    $region42: #{tpu_custom_call.1} parent=1 // pred_check
      _
    $region43: #{tpu_custom_call.1} parent=1 // pred_check_branch
      %74 = sbr.rel (0) target = $region45
    $region44: #{tpu_custom_call.1} parent=1 // pred_region
      %76 = dma.done [#allocation6], 2048
    $region45: #{tpu_custom_call.1} parent=1 // pred_fallthru
      _
    %v77 = vld [vmem:[%s0] sm:$0xff]
    %v78 = vld [vmem:[%s0 + $0x8] sm:$0xff]
    %v79 = vld [vmem:[%s0 + $0x10] sm:$0xff]
    %v80 = vld [vmem:[%s0 + $0x18] sm:$0xff]
    %v81 = vld [vmem:[#allocation2] sm:$0xff]
    %v82 = vld [vmem:[#allocation2 + $0x8] sm:$0xff]
    %v83 = vld [vmem:[#allocation2 + $0x10] sm:$0xff]
    %v84 = vld [vmem:[#allocation2 + $0x18] sm:$0xff]
    %v85 = vld [vmem:[#allocation5] sm:$0xff]
    %v86 = vld [vmem:[#allocation5 + $0x8] sm:$0xff]
    %v87 = vld [vmem:[#allocation5 + $0x10] sm:$0xff]
    %v88 = vld [vmem:[#allocation5 + $0x18] sm:$0xff]
    %v89 = vld [vmem:[%s6] sm:$0xff]
    %v90 = vld [vmem:[%s6 + $0x8] sm:$0xff]
    %v91 = vld [vmem:[%s6 + $0x10] sm:$0x3f]
    %v92 = vld [vmem:[%s4] sm:$0xff]
    %v93 = vld [vmem:[%s4 + $0x8] sm:$0xff]
    %v94 = vld [vmem:[%s4 + $0x10] sm:$0xff]
    %v95 = vld [vmem:[%s4 + $0x18] sm:$0xff]
    %v96 = vperm.slane %v89, 0
    %vm97 = vcmask 261120
    %v99 = vsel %vm97, %v77, 0
    %v102 = vsel %vm97, %v78, 0
    %v105 = vsel %vm97, %v79, 0
    %v108 = vsel %vm97, %v80, 0
    %110 = vmatpush.msra.mxu0 0.0
    %111 = vmatpush.msra.mxu0 0.0
    %112 = vmatpush.msra.mxu0 0.0
    %113 = vmatpush.msra.mxu0 0.0
    %114 = vmatpush.msra.mxu0 0.0
    %115 = vmatpush.msra.mxu0 0.0
    %116 = vmatpush.msra.mxu0 0.0
    %117 = vmatpush.msra.mxu0 0.0
    %118 = vmatpush.msra.mxu0 0.0
    %119 = vmatpush.msra.mxu0 0.0
    %120 = vmatpush.msra.mxu0 0.0
    %121 = vmatpush.msra.mxu0 0.0
    %122 = vmatpush.msra.mxu0 %v95
    %123 = vmatpush.msra.mxu0 %v94
    %124 = vmatpush.msra.mxu0 %v93
    %125 = vmatpush.msra.mxu0 %v92
    %126 = vmatmul.f32.gmra.mxu0 %v99
    %v127 = vpop.f32.mrf.mxu0
    %v128 = vadd.f32 %v96, %v127
    %129 = vmatmul.f32.gmra.mxu0 %v102
    %v130 = vpop.f32.mrf.mxu0
    %v131 = vadd.f32 %v96, %v130
    %132 = vmatmul.f32.gmra.mxu0 %v105
    %v133 = vpop.f32.mrf.mxu0
    %v134 = vadd.f32 %v96, %v133
    %135 = vmatmul.f32.gmra.mxu0 %v108
    %v136 = vpop.f32.mrf.mxu0
    %v137 = vadd.f32 %v96, %v136
    %138 = vdwg.mxu0
    %s139 = scalar_lea.vmem %s4, 32
    %v140 = vld [vmem:[%s139] sm:$0xff]
    %v141 = vld [vmem:[%s139 + $0x8] sm:$0xff]
    %v142 = vld [vmem:[%s139 + $0x10] sm:$0xff]
    %v143 = vld [vmem:[%s139 + $0x18] sm:$0xff]
    %v144 = vperm.slane %v89, 1
    %v146 = vsel %vm97, %v81, 0
    %v149 = vsel %vm97, %v82, 0
    %v152 = vsel %vm97, %v83, 0
    %v155 = vsel %vm97, %v84, 0
    %157 = vmatpush.msra.mxu0 0.0
    %158 = vmatpush.msra.mxu0 0.0
    %159 = vmatpush.msra.mxu0 0.0
    %160 = vmatpush.msra.mxu0 0.0
    %161 = vmatpush.msra.mxu0 0.0
    %162 = vmatpush.msra.mxu0 0.0
    %163 = vmatpush.msra.mxu0 0.0
    %164 = vmatpush.msra.mxu0 0.0
    %165 = vmatpush.msra.mxu0 0.0
    %166 = vmatpush.msra.mxu0 0.0
    %167 = vmatpush.msra.mxu0 0.0
    %168 = vmatpush.msra.mxu0 0.0
    %169 = vmatpush.msra.mxu0 %v143
    %170 = vmatpush.msra.mxu0 %v142
    %171 = vmatpush.msra.mxu0 %v141
    %172 = vmatpush.msra.mxu0 %v140
    %173 = vmatmul.f32.gmra.mxu0 %v146
    %v174 = vpop.f32.mrf.mxu0
    %v175 = vadd.f32 %v144, %v174
    %176 = vmatmul.f32.gmra.mxu0 %v149
    %v177 = vpop.f32.mrf.mxu0
    %v178 = vadd.f32 %v144, %v177
    %179 = vmatmul.f32.gmra.mxu0 %v152
    %v180 = vpop.f32.mrf.mxu0
    %v181 = vadd.f32 %v144, %v180
    %182 = vmatmul.f32.gmra.mxu0 %v155
    %v183 = vpop.f32.mrf.mxu0
    %v184 = vadd.f32 %v144, %v183
    %185 = vdwg.mxu0
    %s186 = scalar_lea.vmem %s4, 64
    %v187 = vld [vmem:[%s186] sm:$0xff]
    %v188 = vld [vmem:[%s186 + $0x8] sm:$0xff]
    %v189 = vld [vmem:[%s186 + $0x10] sm:$0xff]
    %v190 = vld [vmem:[%s186 + $0x18] sm:$0xff]
    %v191 = vperm.slane %v89, 2
    %v193 = vsel %vm97, %v85, 0
    %v196 = vsel %vm97, %v86, 0
    %v199 = vsel %vm97, %v87, 0
    %v202 = vsel %vm97, %v88, 0
    %204 = vmatpush.msra.mxu0 0.0
    %205 = vmatpush.msra.mxu0 0.0
    %206 = vmatpush.msra.mxu0 0.0
    %207 = vmatpush.msra.mxu0 0.0
    %208 = vmatpush.msra.mxu0 0.0
    %209 = vmatpush.msra.mxu0 0.0
    %210 = vmatpush.msra.mxu0 0.0
    %211 = vmatpush.msra.mxu0 0.0
    %212 = vmatpush.msra.mxu0 0.0
    %213 = vmatpush.msra.mxu0 0.0
    %214 = vmatpush.msra.mxu0 0.0
    %215 = vmatpush.msra.mxu0 0.0
    %216 = vmatpush.msra.mxu0 %v190
    %217 = vmatpush.msra.mxu0 %v189
    %218 = vmatpush.msra.mxu0 %v188
    %219 = vmatpush.msra.mxu0 %v187
    %220 = vmatmul.f32.gmra.mxu0 %v193
    %v221 = vpop.f32.mrf.mxu0
    %v222 = vadd.f32 %v191, %v221
    %223 = vmatmul.f32.gmra.mxu0 %v196
    %v224 = vpop.f32.mrf.mxu0
    %v225 = vadd.f32 %v191, %v224
    %226 = vmatmul.f32.gmra.mxu0 %v199
    %v227 = vpop.f32.mrf.mxu0
    %v228 = vadd.f32 %v191, %v227
    %229 = vmatmul.f32.gmra.mxu0 %v202
    %v230 = vpop.f32.mrf.mxu0
    %v231 = vadd.f32 %v191, %v230
    %232 = vdwg.mxu0
    %vm233 = vcmask 64512
    %v235 = vsel %vm233, %v128, 0
    %v238 = vsel %vm233, %v131, 0
    %v241 = vsel %vm233, %v134, 0
    %v244 = vsel %vm233, %v137, 0
    %v247 = vsel %vm233, %v175, 0
    %v250 = vsel %vm233, %v178, 0
    %v253 = vsel %vm233, %v181, 0
    %v256 = vsel %vm233, %v184, 0
    %258 = vmatpush.xpose.msra.mxu0 0.0
    %259 = vmatpush.xpose.msra.mxu0 0.0
    %260 = vmatpush.xpose.msra.mxu0 0.0
    %261 = vmatpush.xpose.msra.mxu0 0.0
    %262 = vmatpush.xpose.msra.mxu0 0.0
    %263 = vmatpush.xpose.msra.mxu0 0.0
    %264 = vmatpush.xpose.msra.mxu0 0.0
    %265 = vmatpush.xpose.msra.mxu0 0.0
    %266 = vmatpush.xpose.msra.mxu0 0.0
    %267 = vmatpush.xpose.msra.mxu0 0.0
    %268 = vmatpush.xpose.msra.mxu0 0.0
    %269 = vmatpush.xpose.msra.mxu0 0.0
    %270 = vmatpush.xpose.msra.mxu0 %v256
    %271 = vmatpush.xpose.msra.mxu0 %v253
    %272 = vmatpush.xpose.msra.mxu0 %v250
    %273 = vmatpush.xpose.msra.mxu0 %v247
    %274 = vmatmul.f32.gmra.mxu0 %v235
    %v275 = vpop.f32.mrf.mxu0
    %v276 = vadd.f32 0.0, %v275
    %277 = vmatmul.f32.gmra.mxu0 %v238
    %v278 = vpop.f32.mrf.mxu0
    %v279 = vadd.f32 0.0, %v278
    %280 = vmatmul.f32.gmra.mxu0 %v241
    %v281 = vpop.f32.mrf.mxu0
    %v282 = vadd.f32 0.0, %v281
    %283 = vmatmul.f32.gmra.mxu0 %v244
    %v284 = vpop.f32.mrf.mxu0
    %v285 = vadd.f32 0.0, %v284
    %286 = vdwg.mxu0
    %v287 = vmul.f32 %v276, 0.35355338
    %v288 = vmul.f32 %v279, 0.35355338
    %v289 = vmul.f32 %v282, 0.35355338
    %v290 = vmul.f32 %v285, 0.35355338
    %v291 = vld [vmem:[#allocation7] sm:$0xff]
    %v292 = vld [vmem:[#allocation7 + $0x8] sm:$0xff]
    %v293 = vld [vmem:[#allocation7 + $0x10] sm:$0xff]
    %v294 = vld [vmem:[#allocation7 + $0x18] sm:$0xff]
    %v295 = vadd.f32 %v287, %v291
    %v296 = vadd.f32 %v288, %v292
    %v297 = vadd.f32 %v289, %v293
    %v298 = vadd.f32 %v290, %v294
    %v299 = vsel %vm97, %v295, -inf
    %300 = vmax.xlane.f32.xlu0 %v299
    %v301 = vpop.xlane.xlu0 %300
    %v302 = vsel %vm97, %v296, -inf
    %303 = vmax.xlane.f32.xlu0 %v302
    %v304 = vpop.xlane.xlu0 %303
    %v305 = vsel %vm97, %v297, -inf
    %306 = vmax.xlane.f32.xlu0 %v305
    %v307 = vpop.xlane.xlu0 %306
    %v308 = vsel %vm97, %v298, -inf
    %309 = vmax.xlane.f32.xlu0 %v308
    %v310 = vpop.xlane.xlu0 %309
    %v311 = vsub.f32 %v295, %v301
    %v312 = vsub.f32 %v296, %v304
    %v313 = vsub.f32 %v297, %v307
    %v314 = vsub.f32 %v298, %v310
    %v315 = vmul.f32 %v311, 1.442695
    %v316 = vpow.pop %v315
    %v317 = vmul.f32 %v312, 1.442695
    %v318 = vpow.pop %v317
    %v319 = vmul.f32 %v313, 1.442695
    %v320 = vpow.pop %v319
    %v321 = vmul.f32 %v314, 1.442695
    %v322 = vpow.pop %v321
    %v323 = vsel %vm97, %v316, 0.0
    %324 = vadd.xlane.f32.xlu0 %v323
    %v325 = vpop.xlane.xlu0 %324
    %v326 = vsel %vm97, %v318, 0.0
    %327 = vadd.xlane.f32.xlu0 %v326
    %v328 = vpop.xlane.xlu0 %327
    %v329 = vsel %vm97, %v320, 0.0
    %330 = vadd.xlane.f32.xlu0 %v329
    %v331 = vpop.xlane.xlu0 %330
    %v332 = vsel %vm97, %v322, 0.0
    %333 = vadd.xlane.f32.xlu0 %v332
    %v334 = vpop.xlane.xlu0 %333
    %v335 = vrcp.pop %v325
    %v336 = vrcp.pop %v328
    %v337 = vrcp.pop %v331
    %v338 = vrcp.pop %v334
    %v339 = vmul.f32 %v316, %v335
    %v340 = vmul.f32 %v318, %v336
    %v341 = vmul.f32 %v320, %v337
    %v342 = vmul.f32 %v322, %v338
    %v344 = vsel %vm97, %v339, 0
    %v347 = vsel %vm97, %v340, 0
    %v350 = vsel %vm97, %v341, 0
    %v353 = vsel %vm97, %v342, 0
    %355 = vmatpush.msra.mxu0 0.0
    %356 = vmatpush.msra.mxu0 0.0
    %357 = vmatpush.msra.mxu0 0.0
    %358 = vmatpush.msra.mxu0 0.0
    %359 = vmatpush.msra.mxu0 0.0
    %360 = vmatpush.msra.mxu0 0.0
    %361 = vmatpush.msra.mxu0 0.0
    %362 = vmatpush.msra.mxu0 0.0
    %363 = vmatpush.msra.mxu0 0.0
    %364 = vmatpush.msra.mxu0 0.0
    %365 = vmatpush.msra.mxu0 0.0
    %366 = vmatpush.msra.mxu0 0.0
    %367 = vmatpush.msra.mxu0 %v231
    %368 = vmatpush.msra.mxu0 %v228
    %369 = vmatpush.msra.mxu0 %v225
    %370 = vmatpush.msra.mxu0 %v222
    %371 = vmatmul.f32.gmra.mxu0 %v344
    %v372 = vpop.f32.mrf.mxu0
    %v373 = vadd.f32 0.0, %v372
    %374 = vmatmul.f32.gmra.mxu0 %v347
    %v375 = vpop.f32.mrf.mxu0
    %v376 = vadd.f32 0.0, %v375
    %377 = vmatmul.f32.gmra.mxu0 %v350
    %v378 = vpop.f32.mrf.mxu0
    %v379 = vadd.f32 0.0, %v378
    %380 = vmatmul.f32.gmra.mxu0 %v353
    %v381 = vpop.f32.mrf.mxu0
    %v382 = vadd.f32 0.0, %v381
    %383 = vdwg.mxu0
    %384 = vrot.lane.b32.xlu0 %v128, 120
    %v385 = vpop.permute.xlu0 %384
    %386 = vrot.lane.b32.xlu0 %v131, 120
    %v387 = vpop.permute.xlu0 %386
    %388 = vrot.lane.b32.xlu0 %v134, 120
    %v389 = vpop.permute.xlu0 %388
    %390 = vrot.lane.b32.xlu0 %v137, 120
    %v391 = vpop.permute.xlu0 %390
    %392 = vrot.lane.b32.xlu0 %v175, 120
    %v393 = vpop.permute.xlu0 %392
    %394 = vrot.lane.b32.xlu0 %v178, 120
    %v395 = vpop.permute.xlu0 %394
    %396 = vrot.lane.b32.xlu0 %v181, 120
    %v397 = vpop.permute.xlu0 %396
    %398 = vrot.lane.b32.xlu0 %v184, 120
    %v399 = vpop.permute.xlu0 %398
    %v400 = vsel %vm233, %v385, 0
    %v402 = vsel %vm233, %v387, 0
    %v404 = vsel %vm233, %v389, 0
    %v406 = vsel %vm233, %v391, 0
    %v408 = vsel %vm233, %v393, 0
    %v410 = vsel %vm233, %v395, 0
    %v412 = vsel %vm233, %v397, 0
    %v414 = vsel %vm233, %v399, 0
    %416 = vmatpush.xpose.msra.mxu0 0.0
    %417 = vmatpush.xpose.msra.mxu0 0.0
    %418 = vmatpush.xpose.msra.mxu0 0.0
    %419 = vmatpush.xpose.msra.mxu0 0.0
    %420 = vmatpush.xpose.msra.mxu0 0.0
    %421 = vmatpush.xpose.msra.mxu0 0.0
    %422 = vmatpush.xpose.msra.mxu0 0.0
    %423 = vmatpush.xpose.msra.mxu0 0.0
    %424 = vmatpush.xpose.msra.mxu0 0.0
    %425 = vmatpush.xpose.msra.mxu0 0.0
    %426 = vmatpush.xpose.msra.mxu0 0.0
    %427 = vmatpush.xpose.msra.mxu0 0.0
    %428 = vmatpush.xpose.msra.mxu0 %v414
    %429 = vmatpush.xpose.msra.mxu0 %v412
    %430 = vmatpush.xpose.msra.mxu0 %v410
    %431 = vmatpush.xpose.msra.mxu0 %v408
    %432 = vmatmul.f32.gmra.mxu0 %v400
    %v433 = vpop.f32.mrf.mxu0
    %v434 = vadd.f32 0.0, %v433
    %435 = vmatmul.f32.gmra.mxu0 %v402
    %v436 = vpop.f32.mrf.mxu0
    %v437 = vadd.f32 0.0, %v436
    %438 = vmatmul.f32.gmra.mxu0 %v404
    %v439 = vpop.f32.mrf.mxu0
    %v440 = vadd.f32 0.0, %v439
    %441 = vmatmul.f32.gmra.mxu0 %v406
    %v442 = vpop.f32.mrf.mxu0
    %v443 = vadd.f32 0.0, %v442
    %444 = vdwg.mxu0
    %v445 = vmul.f32 %v434, 0.35355338
    %v446 = vmul.f32 %v437, 0.35355338
    %v447 = vmul.f32 %v440, 0.35355338
    %v448 = vmul.f32 %v443, 0.35355338
    %s449 = scalar_lea.vmem [#allocation7], 32
    %v450 = vld [vmem:[%s449] sm:$0xff]
    %v451 = vld [vmem:[%s449 + $0x8] sm:$0xff]
    %v452 = vld [vmem:[%s449 + $0x10] sm:$0xff]
    %v453 = vld [vmem:[%s449 + $0x18] sm:$0xff]
    %v454 = vadd.f32 %v445, %v450
    %v455 = vadd.f32 %v446, %v451
    %v456 = vadd.f32 %v447, %v452
    %v457 = vadd.f32 %v448, %v453
    %v458 = vsel %vm97, %v454, -inf
    %459 = vmax.xlane.f32.xlu0 %v458
    %v460 = vpop.xlane.xlu0 %459
    %v461 = vsel %vm97, %v455, -inf
    %462 = vmax.xlane.f32.xlu0 %v461
    %v463 = vpop.xlane.xlu0 %462
    %v464 = vsel %vm97, %v456, -inf
    %465 = vmax.xlane.f32.xlu0 %v464
    %v466 = vpop.xlane.xlu0 %465
    %v467 = vsel %vm97, %v457, -inf
    %468 = vmax.xlane.f32.xlu0 %v467
    %v469 = vpop.xlane.xlu0 %468
    %v470 = vsub.f32 %v454, %v460
    %v471 = vsub.f32 %v455, %v463
    %v472 = vsub.f32 %v456, %v466
    %v473 = vsub.f32 %v457, %v469
    %v474 = vmul.f32 %v470, 1.442695
    %v475 = vpow.pop %v474
    %v476 = vmul.f32 %v471, 1.442695
    %v477 = vpow.pop %v476
    %v478 = vmul.f32 %v472, 1.442695
    %v479 = vpow.pop %v478
    %v480 = vmul.f32 %v473, 1.442695
    %v481 = vpow.pop %v480
    %v482 = vsel %vm97, %v475, 0.0
    %483 = vadd.xlane.f32.xlu0 %v482
    %v484 = vpop.xlane.xlu0 %483
    %v485 = vsel %vm97, %v477, 0.0
    %486 = vadd.xlane.f32.xlu0 %v485
    %v487 = vpop.xlane.xlu0 %486
    %v488 = vsel %vm97, %v479, 0.0
    %489 = vadd.xlane.f32.xlu0 %v488
    %v490 = vpop.xlane.xlu0 %489
    %v491 = vsel %vm97, %v481, 0.0
    %492 = vadd.xlane.f32.xlu0 %v491
    %v493 = vpop.xlane.xlu0 %492
    %v494 = vrcp.pop %v484
    %v495 = vrcp.pop %v487
    %v496 = vrcp.pop %v490
    %v497 = vrcp.pop %v493
    %v498 = vmul.f32 %v475, %v494
    %v499 = vmul.f32 %v477, %v495
    %v500 = vmul.f32 %v479, %v496
    %v501 = vmul.f32 %v481, %v497
    %506 = vrot.lane.b32.xlu0 %v222, 120
    %v507 = vpop.permute.xlu0 %506
    %508 = vrot.lane.b32.xlu0 %v225, 120
    %v509 = vpop.permute.xlu0 %508
    %510 = vrot.lane.b32.xlu0 %v228, 120
    %v511 = vpop.permute.xlu0 %510
    %512 = vrot.lane.b32.xlu0 %v231, 120
    %v513 = vpop.permute.xlu0 %512
    %v519 = vsel %vm97, %v498, 0
    %v522 = vsel %vm97, %v499, 0
    %v525 = vsel %vm97, %v500, 0
    %v528 = vsel %vm97, %v501, 0
    %530 = vmatpush.msra.mxu0 0.0
    %531 = vmatpush.msra.mxu0 0.0
    %532 = vmatpush.msra.mxu0 0.0
    %533 = vmatpush.msra.mxu0 0.0
    %534 = vmatpush.msra.mxu0 0.0
    %535 = vmatpush.msra.mxu0 0.0
    %536 = vmatpush.msra.mxu0 0.0
    %537 = vmatpush.msra.mxu0 0.0
    %538 = vmatpush.msra.mxu0 0.0
    %539 = vmatpush.msra.mxu0 0.0
    %540 = vmatpush.msra.mxu0 0.0
    %541 = vmatpush.msra.mxu0 0.0
    %542 = vmatpush.msra.mxu0 %v513
    %543 = vmatpush.msra.mxu0 %v511
    %544 = vmatpush.msra.mxu0 %v509
    %545 = vmatpush.msra.mxu0 %v507
    %546 = vmatmul.f32.gmra.mxu0 %v519
    %v547 = vpop.f32.mrf.mxu0
    %v548 = vadd.f32 0.0, %v547
    %549 = vmatmul.f32.gmra.mxu0 %v522
    %v550 = vpop.f32.mrf.mxu0
    %v551 = vadd.f32 0.0, %v550
    %552 = vmatmul.f32.gmra.mxu0 %v525
    %v553 = vpop.f32.mrf.mxu0
    %v554 = vadd.f32 0.0, %v553
    %555 = vmatmul.f32.gmra.mxu0 %v528
    %v556 = vpop.f32.mrf.mxu0
    %v557 = vadd.f32 0.0, %v556
    %558 = vdwg.mxu0
    %559 = vrot.lane.b32.xlu0 %v128, 112
    %v560 = vpop.permute.xlu0 %559
    %561 = vrot.lane.b32.xlu0 %v131, 112
    %v562 = vpop.permute.xlu0 %561
    %563 = vrot.lane.b32.xlu0 %v134, 112
    %v564 = vpop.permute.xlu0 %563
    %565 = vrot.lane.b32.xlu0 %v137, 112
    %v566 = vpop.permute.xlu0 %565
    %567 = vrot.lane.b32.xlu0 %v175, 112
    %v568 = vpop.permute.xlu0 %567
    %569 = vrot.lane.b32.xlu0 %v178, 112
    %v570 = vpop.permute.xlu0 %569
    %571 = vrot.lane.b32.xlu0 %v181, 112
    %v572 = vpop.permute.xlu0 %571
    %573 = vrot.lane.b32.xlu0 %v184, 112
    %v574 = vpop.permute.xlu0 %573
    %v575 = vsel %vm233, %v560, 0
    %v577 = vsel %vm233, %v562, 0
    %v579 = vsel %vm233, %v564, 0
    %v581 = vsel %vm233, %v566, 0
    %v583 = vsel %vm233, %v568, 0
    %v585 = vsel %vm233, %v570, 0
    %v587 = vsel %vm233, %v572, 0
    %v589 = vsel %vm233, %v574, 0
    %591 = vmatpush.xpose.msra.mxu0 0.0
    %592 = vmatpush.xpose.msra.mxu0 0.0
    %593 = vmatpush.xpose.msra.mxu0 0.0
    %594 = vmatpush.xpose.msra.mxu0 0.0
    %595 = vmatpush.xpose.msra.mxu0 0.0
    %596 = vmatpush.xpose.msra.mxu0 0.0
    %597 = vmatpush.xpose.msra.mxu0 0.0
    %598 = vmatpush.xpose.msra.mxu0 0.0
    %599 = vmatpush.xpose.msra.mxu0 0.0
    %600 = vmatpush.xpose.msra.mxu0 0.0
    %601 = vmatpush.xpose.msra.mxu0 0.0
    %602 = vmatpush.xpose.msra.mxu0 0.0
    %603 = vmatpush.xpose.msra.mxu0 %v589
    %604 = vmatpush.xpose.msra.mxu0 %v587
    %605 = vmatpush.xpose.msra.mxu0 %v585
    %606 = vmatpush.xpose.msra.mxu0 %v583
    %607 = vmatmul.f32.gmra.mxu0 %v575
    %v608 = vpop.f32.mrf.mxu0
    %v609 = vadd.f32 0.0, %v608
    %610 = vmatmul.f32.gmra.mxu0 %v577
    %v611 = vpop.f32.mrf.mxu0
    %v612 = vadd.f32 0.0, %v611
    %613 = vmatmul.f32.gmra.mxu0 %v579
    %v614 = vpop.f32.mrf.mxu0
    %v615 = vadd.f32 0.0, %v614
    %616 = vmatmul.f32.gmra.mxu0 %v581
    %v617 = vpop.f32.mrf.mxu0
    %v618 = vadd.f32 0.0, %v617
    %619 = vdwg.mxu0
    %v620 = vmul.f32 %v609, 0.35355338
    %v621 = vmul.f32 %v612, 0.35355338
    %v622 = vmul.f32 %v615, 0.35355338
    %v623 = vmul.f32 %v618, 0.35355338
    %s624 = scalar_lea.vmem [#allocation7], 64
    %v625 = vld [vmem:[%s624] sm:$0xff]
    %v626 = vld [vmem:[%s624 + $0x8] sm:$0xff]
    %v627 = vld [vmem:[%s624 + $0x10] sm:$0xff]
    %v628 = vld [vmem:[%s624 + $0x18] sm:$0xff]
    %v629 = vadd.f32 %v620, %v625
    %v630 = vadd.f32 %v621, %v626
    %v631 = vadd.f32 %v622, %v627
    %v632 = vadd.f32 %v623, %v628
    %v633 = vsel %vm97, %v629, -inf
    %634 = vmax.xlane.f32.xlu0 %v633
    %v635 = vpop.xlane.xlu0 %634
    %v636 = vsel %vm97, %v630, -inf
    %637 = vmax.xlane.f32.xlu0 %v636
    %v638 = vpop.xlane.xlu0 %637
    %v639 = vsel %vm97, %v631, -inf
    %640 = vmax.xlane.f32.xlu0 %v639
    %v641 = vpop.xlane.xlu0 %640
    %v642 = vsel %vm97, %v632, -inf
    %643 = vmax.xlane.f32.xlu0 %v642
    %v644 = vpop.xlane.xlu0 %643
    %v645 = vsub.f32 %v629, %v635
    %v646 = vsub.f32 %v630, %v638
    %v647 = vsub.f32 %v631, %v641
    %v648 = vsub.f32 %v632, %v644
    %v649 = vmul.f32 %v645, 1.442695
    %v650 = vpow.pop %v649
    %v651 = vmul.f32 %v646, 1.442695
    %v652 = vpow.pop %v651
    %v653 = vmul.f32 %v647, 1.442695
    %v654 = vpow.pop %v653
    %v655 = vmul.f32 %v648, 1.442695
    %v656 = vpow.pop %v655
    %v657 = vsel %vm97, %v650, 0.0
    %658 = vadd.xlane.f32.xlu0 %v657
    %v659 = vpop.xlane.xlu0 %658
    %v660 = vsel %vm97, %v652, 0.0
    %661 = vadd.xlane.f32.xlu0 %v660
    %v662 = vpop.xlane.xlu0 %661
    %v663 = vsel %vm97, %v654, 0.0
    %664 = vadd.xlane.f32.xlu0 %v663
    %v665 = vpop.xlane.xlu0 %664
    %v666 = vsel %vm97, %v656, 0.0
    %667 = vadd.xlane.f32.xlu0 %v666
    %v668 = vpop.xlane.xlu0 %667
    %v669 = vrcp.pop %v659
    %v670 = vrcp.pop %v662
    %v671 = vrcp.pop %v665
    %v672 = vrcp.pop %v668
    %v673 = vmul.f32 %v650, %v669
    %v674 = vmul.f32 %v652, %v670
    %v675 = vmul.f32 %v654, %v671
    %v676 = vmul.f32 %v656, %v672
    %677 = vrot.lane.b32.xlu0 %v222, 112
    %v678 = vpop.permute.xlu0 %677
    %679 = vrot.lane.b32.xlu0 %v225, 112
    %v680 = vpop.permute.xlu0 %679
    %681 = vrot.lane.b32.xlu0 %v228, 112
    %v682 = vpop.permute.xlu0 %681
    %683 = vrot.lane.b32.xlu0 %v231, 112
    %v684 = vpop.permute.xlu0 %683
    %v690 = vsel %vm97, %v673, 0
    %v693 = vsel %vm97, %v674, 0
    %v696 = vsel %vm97, %v675, 0
    %v699 = vsel %vm97, %v676, 0
    %701 = vmatpush.msra.mxu0 0.0
    %702 = vmatpush.msra.mxu0 0.0
    %703 = vmatpush.msra.mxu0 0.0
    %704 = vmatpush.msra.mxu0 0.0
    %705 = vmatpush.msra.mxu0 0.0
    %706 = vmatpush.msra.mxu0 0.0
    %707 = vmatpush.msra.mxu0 0.0
    %708 = vmatpush.msra.mxu0 0.0
    %709 = vmatpush.msra.mxu0 0.0
    %710 = vmatpush.msra.mxu0 0.0
    %711 = vmatpush.msra.mxu0 0.0
    %712 = vmatpush.msra.mxu0 0.0
    %713 = vmatpush.msra.mxu0 %v684
    %714 = vmatpush.msra.mxu0 %v682
    %715 = vmatpush.msra.mxu0 %v680
    %716 = vmatpush.msra.mxu0 %v678
    %717 = vmatmul.f32.gmra.mxu0 %v690
    %v718 = vpop.f32.mrf.mxu0
    %v719 = vadd.f32 0.0, %v718
    %720 = vmatmul.f32.gmra.mxu0 %v693
    %v721 = vpop.f32.mrf.mxu0
    %v722 = vadd.f32 0.0, %v721
    %723 = vmatmul.f32.gmra.mxu0 %v696
    %v724 = vpop.f32.mrf.mxu0
    %v725 = vadd.f32 0.0, %v724
    %726 = vmatmul.f32.gmra.mxu0 %v699
    %v727 = vpop.f32.mrf.mxu0
    %v728 = vadd.f32 0.0, %v727
    %729 = vdwg.mxu0
    %730 = vrot.lane.b32.xlu0 %v128, 104
    %v731 = vpop.permute.xlu0 %730
    %732 = vrot.lane.b32.xlu0 %v131, 104
    %v733 = vpop.permute.xlu0 %732
    %734 = vrot.lane.b32.xlu0 %v134, 104
    %v735 = vpop.permute.xlu0 %734
    %736 = vrot.lane.b32.xlu0 %v137, 104
    %v737 = vpop.permute.xlu0 %736
    %738 = vrot.lane.b32.xlu0 %v175, 104
    %v739 = vpop.permute.xlu0 %738
    %740 = vrot.lane.b32.xlu0 %v178, 104
    %v741 = vpop.permute.xlu0 %740
    %742 = vrot.lane.b32.xlu0 %v181, 104
    %v743 = vpop.permute.xlu0 %742
    %744 = vrot.lane.b32.xlu0 %v184, 104
    %v745 = vpop.permute.xlu0 %744
    %v746 = vsel %vm233, %v731, 0
    %v748 = vsel %vm233, %v733, 0
    %v750 = vsel %vm233, %v735, 0
    %v752 = vsel %vm233, %v737, 0
    %v754 = vsel %vm233, %v739, 0
    %v756 = vsel %vm233, %v741, 0
    %v758 = vsel %vm233, %v743, 0
    %v760 = vsel %vm233, %v745, 0
    %762 = vmatpush.xpose.msra.mxu0 0.0
    %763 = vmatpush.xpose.msra.mxu0 0.0
    %764 = vmatpush.xpose.msra.mxu0 0.0
    %765 = vmatpush.xpose.msra.mxu0 0.0
    %766 = vmatpush.xpose.msra.mxu0 0.0
    %767 = vmatpush.xpose.msra.mxu0 0.0
    %768 = vmatpush.xpose.msra.mxu0 0.0
    %769 = vmatpush.xpose.msra.mxu0 0.0
    %770 = vmatpush.xpose.msra.mxu0 0.0
    %771 = vmatpush.xpose.msra.mxu0 0.0
    %772 = vmatpush.xpose.msra.mxu0 0.0
    %773 = vmatpush.xpose.msra.mxu0 0.0
    %774 = vmatpush.xpose.msra.mxu0 %v760
    %775 = vmatpush.xpose.msra.mxu0 %v758
    %776 = vmatpush.xpose.msra.mxu0 %v756
    %777 = vmatpush.xpose.msra.mxu0 %v754
    %778 = vmatmul.f32.gmra.mxu0 %v746
    %v779 = vpop.f32.mrf.mxu0
    %v780 = vadd.f32 0.0, %v779
    %781 = vmatmul.f32.gmra.mxu0 %v748
    %v782 = vpop.f32.mrf.mxu0
    %v783 = vadd.f32 0.0, %v782
    %784 = vmatmul.f32.gmra.mxu0 %v750
    %v785 = vpop.f32.mrf.mxu0
    %v786 = vadd.f32 0.0, %v785
    %787 = vmatmul.f32.gmra.mxu0 %v752
    %v788 = vpop.f32.mrf.mxu0
    %v789 = vadd.f32 0.0, %v788
    %790 = vdwg.mxu0
    %v791 = vmul.f32 %v780, 0.35355338
    %v792 = vmul.f32 %v783, 0.35355338
    %v793 = vmul.f32 %v786, 0.35355338
    %v794 = vmul.f32 %v789, 0.35355338
    %s795 = scalar_lea.vmem [#allocation7], 96
    %v796 = vld [vmem:[%s795] sm:$0xff]
    %v797 = vld [vmem:[%s795 + $0x8] sm:$0xff]
    %v798 = vld [vmem:[%s795 + $0x10] sm:$0xff]
    %v799 = vld [vmem:[%s795 + $0x18] sm:$0xff]
    %v800 = vadd.f32 %v791, %v796
    %v801 = vadd.f32 %v792, %v797
    %v802 = vadd.f32 %v793, %v798
    %v803 = vadd.f32 %v794, %v799
    %v804 = vsel %vm97, %v800, -inf
    %805 = vmax.xlane.f32.xlu0 %v804
    %v806 = vpop.xlane.xlu0 %805
    %v807 = vsel %vm97, %v801, -inf
    %808 = vmax.xlane.f32.xlu0 %v807
    %v809 = vpop.xlane.xlu0 %808
    %v810 = vsel %vm97, %v802, -inf
    %811 = vmax.xlane.f32.xlu0 %v810
    %v812 = vpop.xlane.xlu0 %811
    %v813 = vsel %vm97, %v803, -inf
    %814 = vmax.xlane.f32.xlu0 %v813
    %v815 = vpop.xlane.xlu0 %814
    %v816 = vsub.f32 %v800, %v806
    %v817 = vsub.f32 %v801, %v809
    %v818 = vsub.f32 %v802, %v812
    %v819 = vsub.f32 %v803, %v815
    %v820 = vmul.f32 %v816, 1.442695
    %v821 = vpow.pop %v820
    %v822 = vmul.f32 %v817, 1.442695
    %v823 = vpow.pop %v822
    %v824 = vmul.f32 %v818, 1.442695
    %v825 = vpow.pop %v824
    %v826 = vmul.f32 %v819, 1.442695
    %v827 = vpow.pop %v826
    %v828 = vsel %vm97, %v821, 0.0
    %829 = vadd.xlane.f32.xlu0 %v828
    %v830 = vpop.xlane.xlu0 %829
    %v831 = vsel %vm97, %v823, 0.0
    %832 = vadd.xlane.f32.xlu0 %v831
    %v833 = vpop.xlane.xlu0 %832
    %v834 = vsel %vm97, %v825, 0.0
    %835 = vadd.xlane.f32.xlu0 %v834
    %v836 = vpop.xlane.xlu0 %835
    %v837 = vsel %vm97, %v827, 0.0
    %838 = vadd.xlane.f32.xlu0 %v837
    %v839 = vpop.xlane.xlu0 %838
    %v840 = vrcp.pop %v830
    %v841 = vrcp.pop %v833
    %v842 = vrcp.pop %v836
    %v843 = vrcp.pop %v839
    %v844 = vmul.f32 %v821, %v840
    %v845 = vmul.f32 %v823, %v841
    %v846 = vmul.f32 %v825, %v842
    %v847 = vmul.f32 %v827, %v843
    %848 = vrot.lane.b32.xlu0 %v222, 104
    %v849 = vpop.permute.xlu0 %848
    %850 = vrot.lane.b32.xlu0 %v225, 104
    %v851 = vpop.permute.xlu0 %850
    %852 = vrot.lane.b32.xlu0 %v228, 104
    %v853 = vpop.permute.xlu0 %852
    %854 = vrot.lane.b32.xlu0 %v231, 104
    %v855 = vpop.permute.xlu0 %854
    %v861 = vsel %vm97, %v844, 0
    %v864 = vsel %vm97, %v845, 0
    %v867 = vsel %vm97, %v846, 0
    %v870 = vsel %vm97, %v847, 0
    %872 = vmatpush.msra.mxu0 0.0
    %873 = vmatpush.msra.mxu0 0.0
    %874 = vmatpush.msra.mxu0 0.0
    %875 = vmatpush.msra.mxu0 0.0
    %876 = vmatpush.msra.mxu0 0.0
    %877 = vmatpush.msra.mxu0 0.0
    %878 = vmatpush.msra.mxu0 0.0
    %879 = vmatpush.msra.mxu0 0.0
    %880 = vmatpush.msra.mxu0 0.0
    %881 = vmatpush.msra.mxu0 0.0
    %882 = vmatpush.msra.mxu0 0.0
    %883 = vmatpush.msra.mxu0 0.0
    %884 = vmatpush.msra.mxu0 %v855
    %885 = vmatpush.msra.mxu0 %v853
    %886 = vmatpush.msra.mxu0 %v851
    %887 = vmatpush.msra.mxu0 %v849
    %888 = vmatmul.f32.gmra.mxu0 %v861
    %v889 = vpop.f32.mrf.mxu0
    %v890 = vadd.f32 0.0, %v889
    %891 = vmatmul.f32.gmra.mxu0 %v864
    %v892 = vpop.f32.mrf.mxu0
    %v893 = vadd.f32 0.0, %v892
    %894 = vmatmul.f32.gmra.mxu0 %v867
    %v895 = vpop.f32.mrf.mxu0
    %v896 = vadd.f32 0.0, %v895
    %897 = vmatmul.f32.gmra.mxu0 %v870
    %v898 = vpop.f32.mrf.mxu0
    %v899 = vadd.f32 0.0, %v898
    %900 = vdwg.mxu0
    %905 = vrot.lane.b32.xlu0 %v548, 8
    %v906 = vpop.permute.xlu0 %905
    %907 = vrot.lane.b32.xlu0 %v551, 8
    %v908 = vpop.permute.xlu0 %907
    %909 = vrot.lane.b32.xlu0 %v554, 8
    %v910 = vpop.permute.xlu0 %909
    %911 = vrot.lane.b32.xlu0 %v557, 8
    %v912 = vpop.permute.xlu0 %911
    %921 = vrot.lane.b32.xlu0 %v719, 16
    %v922 = vpop.permute.xlu0 %921
    %923 = vrot.lane.b32.xlu0 %v722, 16
    %v924 = vpop.permute.xlu0 %923
    %925 = vrot.lane.b32.xlu0 %v725, 16
    %v926 = vpop.permute.xlu0 %925
    %927 = vrot.lane.b32.xlu0 %v728, 16
    %v928 = vpop.permute.xlu0 %927
    %937 = vrot.lane.b32.xlu0 %v890, 24
    %v938 = vpop.permute.xlu0 %937
    %939 = vrot.lane.b32.xlu0 %v893, 24
    %v940 = vpop.permute.xlu0 %939
    %941 = vrot.lane.b32.xlu0 %v896, 24
    %v942 = vpop.permute.xlu0 %941
    %943 = vrot.lane.b32.xlu0 %v899, 24
    %v944 = vpop.permute.xlu0 %943
    %v949 = vsel %vm233, %v373, %v906
    %v950 = vsel %vm233, %v376, %v908
    %v951 = vsel %vm233, %v379, %v910
    %v952 = vsel %vm233, %v382, %v912
    %vm953 = vcmask 130048
    %v954 = vsel %vm953, %v949, %v922
    %v955 = vsel %vm953, %v950, %v924
    %v956 = vsel %vm953, %v951, %v926
    %v957 = vsel %vm953, %v952, %v928
    %vm958 = vcmask 195584
    %v959 = vsel %vm958, %v954, %v938
    %v960 = vsel %vm958, %v955, %v940
    %v961 = vsel %vm958, %v956, %v942
    %v962 = vsel %vm958, %v957, %v944
    %s963 = scalar_lea.vmem %s4, 96
    %v964 = vld [vmem:[%s963] sm:$0xff]
    %v965 = vld [vmem:[%s963 + $0x8] sm:$0xff]
    %v966 = vld [vmem:[%s963 + $0x10] sm:$0xff]
    %v967 = vld [vmem:[%s963 + $0x18] sm:$0xff]
    %v968 = vperm.slane %v89, 3
    %v970 = vsel %vm97, %v959, 0
    %v973 = vsel %vm97, %v960, 0
    %v976 = vsel %vm97, %v961, 0
    %v979 = vsel %vm97, %v962, 0
    %981 = vmatpush.msra.mxu0 0.0
    %982 = vmatpush.msra.mxu0 0.0
    %983 = vmatpush.msra.mxu0 0.0
    %984 = vmatpush.msra.mxu0 0.0
    %985 = vmatpush.msra.mxu0 0.0
    %986 = vmatpush.msra.mxu0 0.0
    %987 = vmatpush.msra.mxu0 0.0
    %988 = vmatpush.msra.mxu0 0.0
    %989 = vmatpush.msra.mxu0 0.0
    %990 = vmatpush.msra.mxu0 0.0
    %991 = vmatpush.msra.mxu0 0.0
    %992 = vmatpush.msra.mxu0 0.0
    %993 = vmatpush.msra.mxu0 %v967
    %994 = vmatpush.msra.mxu0 %v966
    %995 = vmatpush.msra.mxu0 %v965
    %996 = vmatpush.msra.mxu0 %v964
    %997 = vmatmul.f32.gmra.mxu0 %v970
    %v998 = vpop.f32.mrf.mxu0
    %v999 = vadd.f32 %v968, %v998
    %1000 = vmatmul.f32.gmra.mxu0 %v973
    %v1001 = vpop.f32.mrf.mxu0
    %v1002 = vadd.f32 %v968, %v1001
    %1003 = vmatmul.f32.gmra.mxu0 %v976
    %v1004 = vpop.f32.mrf.mxu0
    %v1005 = vadd.f32 %v968, %v1004
    %1006 = vmatmul.f32.gmra.mxu0 %v979
    %v1007 = vpop.f32.mrf.mxu0
    %v1008 = vadd.f32 %v968, %v1007
    %1009 = vdwg.mxu0
    %v1010 = vadd.f32 %v77, %v999
    %v1011 = vadd.f32 %v78, %v1002
    %v1012 = vadd.f32 %v79, %v1005
    %v1013 = vadd.f32 %v80, %v1008
    %v1014 = vsel %vm97, %v1010, 0.0
    %1015 = vadd.xlane.f32.xlu0 %v1014
    %v1016 = vpop.xlane.xlu0 %1015
    %v1017 = vsel %vm97, %v1011, 0.0
    %1018 = vadd.xlane.f32.xlu0 %v1017
    %v1019 = vpop.xlane.xlu0 %1018
    %v1020 = vsel %vm97, %v1012, 0.0
    %1021 = vadd.xlane.f32.xlu0 %v1020
    %v1022 = vpop.xlane.xlu0 %1021
    %v1023 = vsel %vm97, %v1013, 0.0
    %1024 = vadd.xlane.f32.xlu0 %v1023
    %v1025 = vpop.xlane.xlu0 %1024
    %v1026 = vrcp.pop 32.0
    %v1027 = vmul.f32 32.0, %v1026
    %v1028 = vsub.f32 1.0, %v1027
    %v1029 = vmul.f32 %v1026, %v1028
    %v1030 = vadd.f32 %v1026, %v1029
    %vm1031 = vweird.f32 %v1026
    %v1032 = vsel %vm1031, %v1026, %v1030
    %v1033 = vmul.f32 %v1016, %v1032
    %v1034 = vmul.f32 %v1019, %v1032
    %v1035 = vmul.f32 %v1022, %v1032
    %v1036 = vmul.f32 %v1025, %v1032
    %v1037 = vsub.f32 %v1010, %v1033
    %v1038 = vsub.f32 %v1011, %v1034
    %v1039 = vsub.f32 %v1012, %v1035
    %v1040 = vsub.f32 %v1013, %v1036
    %v1041 = vmul.f32 %v1037, %v1037
    %v1042 = vmul.f32 %v1038, %v1038
    %v1043 = vmul.f32 %v1039, %v1039
    %v1044 = vmul.f32 %v1040, %v1040
    %v1045 = vsel %vm97, %v1041, 0.0
    %1046 = vadd.xlane.f32.xlu0 %v1045
    %v1047 = vpop.xlane.xlu0 %1046
    %v1048 = vsel %vm97, %v1042, 0.0
    %1049 = vadd.xlane.f32.xlu0 %v1048
    %v1050 = vpop.xlane.xlu0 %1049
    %v1051 = vsel %vm97, %v1043, 0.0
    %1052 = vadd.xlane.f32.xlu0 %v1051
    %v1053 = vpop.xlane.xlu0 %1052
    %v1054 = vsel %vm97, %v1044, 0.0
    %1055 = vadd.xlane.f32.xlu0 %v1054
    %v1056 = vpop.xlane.xlu0 %1055
    %v1057 = vmul.f32 %v1047, %v1032
    %v1058 = vmul.f32 %v1050, %v1032
    %v1059 = vmul.f32 %v1053, %v1032
    %v1060 = vmul.f32 %v1056, %v1032
    %v1061 = vadd.f32 %v1057, 1e-05
    %v1062 = vadd.f32 %v1058, 1e-05
    %v1063 = vadd.f32 %v1059, 1e-05
    %v1064 = vadd.f32 %v1060, 1e-05
    %v1065 = vrsqrt.pop %v1061
    %v1066 = vmul.f32 %v1065, %v1061
    %v1067 = vmul.f32 %v1066, %v1065
    %v1068 = vmul.f32 0.5, %v1067
    %v1069 = vsub.f32 1.5, %v1068
    %v1070 = vmul.f32 %v1065, %v1069
    %vm1071 = vweird.f32 %v1061
    %vm1072 = vweird.f32 %v1065
    %vm1073 = vmor %vm1071, %vm1072
    %v1074 = vsel %vm1073, %v1065, %v1070
    %v1075 = vrsqrt.pop %v1062
    %v1076 = vmul.f32 %v1075, %v1062
    %v1077 = vmul.f32 %v1076, %v1075
    %v1078 = vmul.f32 0.5, %v1077
    %v1079 = vsub.f32 1.5, %v1078
    %v1080 = vmul.f32 %v1075, %v1079
    %vm1081 = vweird.f32 %v1062
    %vm1082 = vweird.f32 %v1075
    %vm1083 = vmor %vm1081, %vm1082
    %v1084 = vsel %vm1083, %v1075, %v1080
    %v1085 = vrsqrt.pop %v1063
    %v1086 = vmul.f32 %v1085, %v1063
    %v1087 = vmul.f32 %v1086, %v1085
    %v1088 = vmul.f32 0.5, %v1087
    %v1089 = vsub.f32 1.5, %v1088
    %v1090 = vmul.f32 %v1085, %v1089
    %vm1091 = vweird.f32 %v1063
    %vm1092 = vweird.f32 %v1085
    %vm1093 = vmor %vm1091, %vm1092
    %v1094 = vsel %vm1093, %v1085, %v1090
    %v1095 = vrsqrt.pop %v1064
    %v1096 = vmul.f32 %v1095, %v1064
    %v1097 = vmul.f32 %v1096, %v1095
    %v1098 = vmul.f32 0.5, %v1097
    %v1099 = vsub.f32 1.5, %v1098
    %v1100 = vmul.f32 %v1095, %v1099
    %vm1101 = vweird.f32 %v1064
    %vm1102 = vweird.f32 %v1095
    %vm1103 = vmor %vm1101, %vm1102
    %v1104 = vsel %vm1103, %v1095, %v1100
    %v1105 = vmul.f32 %v1037, %v1074
    %v1106 = vmul.f32 %v1038, %v1084
    %v1107 = vmul.f32 %v1039, %v1094
    %v1108 = vmul.f32 %v1040, %v1104
    %v1109 = vperm.slane %v89, 4
    %v1110 = vmul.f32 %v1105, %v1109
    %v1111 = vmul.f32 %v1106, %v1109
    %v1112 = vmul.f32 %v1107, %v1109
    %v1113 = vmul.f32 %v1108, %v1109
    %v1114 = vperm.slane %v89, 5
    %v1115 = vadd.f32 %v1110, %v1114
    %v1116 = vadd.f32 %v1111, %v1114
    %v1117 = vadd.f32 %v1112, %v1114
    %v1118 = vadd.f32 %v1113, %v1114
    %v1119 = vld [vmem:[%s7] sm:$0xff]
    %v1120 = vld [vmem:[%s7 + $0x8] sm:$0xff]
    %v1121 = vld [vmem:[%s7 + $0x10] sm:$0xff]
    %v1122 = vld [vmem:[%s7 + $0x18] sm:$0xff]
    %v1123 = vperm.slane %v91, 1
    %v1124 = vmul.f32 %v1115, %v1123
    %v1125 = vmul.f32 %v1116, %v1123
    %v1126 = vmul.f32 %v1117, %v1123
    %v1127 = vmul.f32 %v1118, %v1123
    %v1128 = vrot.slane %v1115, 3
    %v1129 = vrot.slane %v1116, 3
    %v1130 = vrot.slane %v1117, 3
    %v1131 = vrot.slane %v1118, 3
    %v1132 = vlaneseq
    %v1133 = vshrl.u32 %v1132, 7
    %vm1134 = vcmp.lt.s32.totalorder %v1133, 5
    %v1135 = vsel %vm1134, %v1130, %v1131
    %v1136 = vsel %vm1134, %v1129, %v1130
    %v1137 = vsel %vm1134, %v1128, %v1129
    %v1138 = vsel %vm1134, %v1131, %v1128
    %1140 = vset.pattern.permute.xlu0 0
    %1141 = vperm.xlu0 %1140, %v1119
    %v1142 = vpop.permute.xlu0 %1141
    %1145 = vset.pattern.permute.xlu0 0
    %1146 = vperm.xlu0 %1145, %v1120
    %v1147 = vpop.permute.xlu0 %1146
    %1150 = vset.pattern.permute.xlu0 0
    %1151 = vperm.xlu0 %1150, %v1121
    %v1152 = vpop.permute.xlu0 %1151
    %1155 = vset.pattern.permute.xlu0 0
    %1156 = vperm.xlu0 %1155, %v1122
    %v1157 = vpop.permute.xlu0 %1156
    %v1159 = vmul.f32 %v1138, %v1142
    %v1160 = vmul.f32 %v1137, %v1147
    %v1161 = vmul.f32 %v1136, %v1152
    %v1162 = vmul.f32 %v1135, %v1157
    %v1163 = vperm.slane %v90, 5
    %v1164 = vmul.f32 %v1159, %v1163
    %v1165 = vmul.f32 %v1160, %v1163
    %v1166 = vmul.f32 %v1161, %v1163
    %v1167 = vmul.f32 %v1162, %v1163
    %v1168 = vadd.f32 %v1124, %v1164
    %v1169 = vadd.f32 %v1125, %v1165
    %v1170 = vadd.f32 %v1126, %v1166
    %v1171 = vadd.f32 %v1127, %v1167
    %v1172 = vrot.slane %v1115, 4
    %v1173 = vrot.slane %v1116, 4
    %v1174 = vrot.slane %v1117, 4
    %v1175 = vrot.slane %v1118, 4
    %vm1176 = vcmp.lt.s32.totalorder %v1133, 4
    %v1177 = vsel %vm1176, %v1174, %v1175
    %v1178 = vsel %vm1176, %v1173, %v1174
    %v1179 = vsel %vm1176, %v1172, %v1173
    %v1180 = vsel %vm1176, %v1175, %v1172
    %1181 = vset.pattern.permute.xlu0 1
    %1182 = vperm.xlu0 %1181, %v1119
    %v1183 = vpop.permute.xlu0 %1182
    %1185 = vset.pattern.permute.xlu0 1
    %1186 = vperm.xlu0 %1185, %v1120
    %v1187 = vpop.permute.xlu0 %1186
    %1189 = vset.pattern.permute.xlu0 1
    %1190 = vperm.xlu0 %1189, %v1121
    %v1191 = vpop.permute.xlu0 %1190
    %1193 = vset.pattern.permute.xlu0 1
    %1194 = vperm.xlu0 %1193, %v1122
    %v1195 = vpop.permute.xlu0 %1194
    %v1197 = vmul.f32 %v1180, %v1183
    %v1198 = vmul.f32 %v1179, %v1187
    %v1199 = vmul.f32 %v1178, %v1191
    %v1200 = vmul.f32 %v1177, %v1195
    %v1201 = vperm.slane %v90, 6
    %v1202 = vmul.f32 %v1197, %v1201
    %v1203 = vmul.f32 %v1198, %v1201
    %v1204 = vmul.f32 %v1199, %v1201
    %v1205 = vmul.f32 %v1200, %v1201
    %v1206 = vadd.f32 %v1168, %v1202
    %v1207 = vadd.f32 %v1169, %v1203
    %v1208 = vadd.f32 %v1170, %v1204
    %v1209 = vadd.f32 %v1171, %v1205
    %v1210 = vrot.slane %v1115, 5
    %v1211 = vrot.slane %v1116, 5
    %v1212 = vrot.slane %v1117, 5
    %v1213 = vrot.slane %v1118, 5
    %vm1214 = vcmp.lt.s32.totalorder %v1133, 3
    %v1215 = vsel %vm1214, %v1212, %v1213
    %v1216 = vsel %vm1214, %v1211, %v1212
    %v1217 = vsel %vm1214, %v1210, %v1211
    %v1218 = vsel %vm1214, %v1213, %v1210
    %1219 = vset.pattern.permute.xlu0 2
    %1220 = vperm.xlu0 %1219, %v1119
    %v1221 = vpop.permute.xlu0 %1220
    %1223 = vset.pattern.permute.xlu0 2
    %1224 = vperm.xlu0 %1223, %v1120
    %v1225 = vpop.permute.xlu0 %1224
    %1227 = vset.pattern.permute.xlu0 2
    %1228 = vperm.xlu0 %1227, %v1121
    %v1229 = vpop.permute.xlu0 %1228
    %1231 = vset.pattern.permute.xlu0 2
    %1232 = vperm.xlu0 %1231, %v1122
    %v1233 = vpop.permute.xlu0 %1232
    %v1235 = vmul.f32 %v1218, %v1221
    %v1236 = vmul.f32 %v1217, %v1225
    %v1237 = vmul.f32 %v1216, %v1229
    %v1238 = vmul.f32 %v1215, %v1233
    %v1239 = vperm.slane %v90, 7
    %v1240 = vmul.f32 %v1235, %v1239
    %v1241 = vmul.f32 %v1236, %v1239
    %v1242 = vmul.f32 %v1237, %v1239
    %v1243 = vmul.f32 %v1238, %v1239
    %v1244 = vadd.f32 %v1206, %v1240
    %v1245 = vadd.f32 %v1207, %v1241
    %v1246 = vadd.f32 %v1208, %v1242
    %v1247 = vadd.f32 %v1209, %v1243
    %v1248 = vrot.slane %v1115, 7
    %v1249 = vrot.slane %v1116, 7
    %v1250 = vrot.slane %v1117, 7
    %v1251 = vrot.slane %v1118, 7
    %vm1252 = vcmp.lt.s32.totalorder %v1133, 1
    %v1253 = vsel %vm1252, %v1250, %v1251
    %v1254 = vsel %vm1252, %v1249, %v1250
    %v1255 = vsel %vm1252, %v1248, %v1249
    %v1256 = vsel %vm1252, %v1251, %v1248
    %1257 = vset.pattern.permute.xlu0 3
    %1258 = vperm.xlu0 %1257, %v1119
    %v1259 = vpop.permute.xlu0 %1258
    %1261 = vset.pattern.permute.xlu0 3
    %1262 = vperm.xlu0 %1261, %v1120
    %v1263 = vpop.permute.xlu0 %1262
    %1265 = vset.pattern.permute.xlu0 3
    %1266 = vperm.xlu0 %1265, %v1121
    %v1267 = vpop.permute.xlu0 %1266
    %1269 = vset.pattern.permute.xlu0 3
    %1270 = vperm.xlu0 %1269, %v1122
    %v1271 = vpop.permute.xlu0 %1270
    %v1273 = vmul.f32 %v1256, %v1259
    %v1274 = vmul.f32 %v1255, %v1263
    %v1275 = vmul.f32 %v1254, %v1267
    %v1276 = vmul.f32 %v1253, %v1271
    %v1277 = vperm.slane %v91, 0
    %v1278 = vmul.f32 %v1273, %v1277
    %v1279 = vmul.f32 %v1274, %v1277
    %v1280 = vmul.f32 %v1275, %v1277
    %v1281 = vmul.f32 %v1276, %v1277
    %v1282 = vadd.f32 %v1244, %v1278
    %v1283 = vadd.f32 %v1245, %v1279
    %v1284 = vadd.f32 %v1246, %v1280
    %v1285 = vadd.f32 %v1247, %v1281
    %v1286 = vrot.slane %v1115, 1
    %v1287 = vrot.slane %v1116, 1
    %v1288 = vrot.slane %v1117, 1
    %v1289 = vrot.slane %v1118, 1
    %vm1290 = vcmp.lt.s32.totalorder %v1133, 7
    %v1291 = vsel %vm1290, %v1288, %v1289
    %v1292 = vsel %vm1290, %v1287, %v1288
    %v1293 = vsel %vm1290, %v1286, %v1287
    %v1294 = vsel %vm1290, %v1289, %v1286
    %1295 = vset.pattern.permute.xlu0 5
    %1296 = vperm.xlu0 %1295, %v1119
    %v1297 = vpop.permute.xlu0 %1296
    %1299 = vset.pattern.permute.xlu0 5
    %1300 = vperm.xlu0 %1299, %v1120
    %v1301 = vpop.permute.xlu0 %1300
    %1303 = vset.pattern.permute.xlu0 5
    %1304 = vperm.xlu0 %1303, %v1121
    %v1305 = vpop.permute.xlu0 %1304
    %1307 = vset.pattern.permute.xlu0 5
    %1308 = vperm.xlu0 %1307, %v1122
    %v1309 = vpop.permute.xlu0 %1308
    %v1311 = vmul.f32 %v1293, %v1297
    %v1312 = vmul.f32 %v1292, %v1301
    %v1313 = vmul.f32 %v1291, %v1305
    %v1314 = vmul.f32 %v1294, %v1309
    %v1315 = vperm.slane %v91, 2
    %v1316 = vmul.f32 %v1311, %v1315
    %v1317 = vmul.f32 %v1312, %v1315
    %v1318 = vmul.f32 %v1313, %v1315
    %v1319 = vmul.f32 %v1314, %v1315
    %v1320 = vadd.f32 %v1282, %v1316
    %v1321 = vadd.f32 %v1283, %v1317
    %v1322 = vadd.f32 %v1284, %v1318
    %v1323 = vadd.f32 %v1285, %v1319
    %1324 = vset.pattern.permute.xlu0 6
    %1325 = vperm.xlu0 %1324, %v1119
    %v1326 = vpop.permute.xlu0 %1325
    %1328 = vset.pattern.permute.xlu0 6
    %1329 = vperm.xlu0 %1328, %v1120
    %v1330 = vpop.permute.xlu0 %1329
    %1332 = vset.pattern.permute.xlu0 6
    %1333 = vperm.xlu0 %1332, %v1121
    %v1334 = vpop.permute.xlu0 %1333
    %1336 = vset.pattern.permute.xlu0 6
    %1337 = vperm.xlu0 %1336, %v1122
    %v1338 = vpop.permute.xlu0 %1337
    %v1340 = vmul.f32 %v1137, %v1326
    %v1341 = vmul.f32 %v1136, %v1330
    %v1342 = vmul.f32 %v1135, %v1334
    %v1343 = vmul.f32 %v1138, %v1338
    %v1344 = vperm.slane %v91, 3
    %v1345 = vmul.f32 %v1340, %v1344
    %v1346 = vmul.f32 %v1341, %v1344
    %v1347 = vmul.f32 %v1342, %v1344
    %v1348 = vmul.f32 %v1343, %v1344
    %v1349 = vadd.f32 %v1320, %v1345
    %v1350 = vadd.f32 %v1321, %v1346
    %v1351 = vadd.f32 %v1322, %v1347
    %v1352 = vadd.f32 %v1323, %v1348
    %1353 = vset.pattern.permute.xlu0 7
    %1354 = vperm.xlu0 %1353, %v1119
    %v1355 = vpop.permute.xlu0 %1354
    %1357 = vset.pattern.permute.xlu0 7
    %1358 = vperm.xlu0 %1357, %v1120
    %v1359 = vpop.permute.xlu0 %1358
    %1361 = vset.pattern.permute.xlu0 7
    %1362 = vperm.xlu0 %1361, %v1121
    %v1363 = vpop.permute.xlu0 %1362
    %1365 = vset.pattern.permute.xlu0 7
    %1366 = vperm.xlu0 %1365, %v1122
    %v1367 = vpop.permute.xlu0 %1366
    %v1369 = vmul.f32 %v1179, %v1355
    %v1370 = vmul.f32 %v1178, %v1359
    %v1371 = vmul.f32 %v1177, %v1363
    %v1372 = vmul.f32 %v1180, %v1367
    %v1373 = vperm.slane %v91, 4
    %v1374 = vmul.f32 %v1369, %v1373
    %v1375 = vmul.f32 %v1370, %v1373
    %v1376 = vmul.f32 %v1371, %v1373
    %v1377 = vmul.f32 %v1372, %v1373
    %v1378 = vadd.f32 %v1349, %v1374
    %v1379 = vadd.f32 %v1350, %v1375
    %v1380 = vadd.f32 %v1351, %v1376
    %v1381 = vadd.f32 %v1352, %v1377
    %1382 = vset.pattern.permute.xlu0 8
    %1383 = vperm.xlu0 %1382, %v1119
    %v1384 = vpop.permute.xlu0 %1383
    %1386 = vset.pattern.permute.xlu0 8
    %1387 = vperm.xlu0 %1386, %v1120
    %v1388 = vpop.permute.xlu0 %1387
    %1390 = vset.pattern.permute.xlu0 8
    %1391 = vperm.xlu0 %1390, %v1121
    %v1392 = vpop.permute.xlu0 %1391
    %1394 = vset.pattern.permute.xlu0 8
    %1395 = vperm.xlu0 %1394, %v1122
    %v1396 = vpop.permute.xlu0 %1395
    %v1398 = vmul.f32 %v1217, %v1384
    %v1399 = vmul.f32 %v1216, %v1388
    %v1400 = vmul.f32 %v1215, %v1392
    %v1401 = vmul.f32 %v1218, %v1396
    %v1402 = vperm.slane %v91, 5
    %v1403 = vmul.f32 %v1398, %v1402
    %v1404 = vmul.f32 %v1399, %v1402
    %v1405 = vmul.f32 %v1400, %v1402
    %v1406 = vmul.f32 %v1401, %v1402
    %v1407 = vadd.f32 %v1378, %v1403
    %v1408 = vadd.f32 %v1379, %v1404
    %v1409 = vadd.f32 %v1380, %v1405
    %v1410 = vadd.f32 %v1381, %v1406
    %v1411 = vperm.slane %v89, 6
    %v1412 = vadd.f32 %v1407, %v1411
    %v1413 = vadd.f32 %v1408, %v1411
    %v1414 = vadd.f32 %v1409, %v1411
    %v1415 = vadd.f32 %v1410, %v1411
    %v1416 = vmul.f32 %v1412, %v1412
    %v1417 = vmul.f32 %v1413, %v1413
    %v1418 = vmul.f32 %v1414, %v1414
    %v1419 = vmul.f32 %v1415, %v1415
    %v1420 = vmul.f32 %v1412, 0.5
    %v1421 = vmul.f32 %v1413, 0.5
    %v1422 = vmul.f32 %v1414, 0.5
    %v1423 = vmul.f32 %v1415, 0.5
    %v1424 = vmul.f32 %v1412, 0.7978846
    %v1425 = vmul.f32 %v1413, 0.7978846
    %v1426 = vmul.f32 %v1414, 0.7978846
    %v1427 = vmul.f32 %v1415, 0.7978846
    %v1428 = vmul.f32 %v1416, 0.044715
    %v1429 = vmul.f32 %v1417, 0.044715
    %v1430 = vmul.f32 %v1418, 0.044715
    %v1431 = vmul.f32 %v1419, 0.044715
    %v1432 = vadd.f32 %v1428, 1.0
    %v1433 = vadd.f32 %v1429, 1.0
    %v1434 = vadd.f32 %v1430, 1.0
    %v1435 = vadd.f32 %v1431, 1.0
    %v1436 = vmul.f32 %v1424, %v1432
    %v1437 = vmul.f32 %v1425, %v1433
    %v1438 = vmul.f32 %v1426, %v1434
    %v1439 = vmul.f32 %v1427, %v1435
    %v1440 = vtanh.pop %v1436
    %v1441 = vtanh.pop %v1437
    %v1442 = vtanh.pop %v1438
    %v1443 = vtanh.pop %v1439
    %v1444 = vadd.f32 %v1440, 1.0
    %v1445 = vadd.f32 %v1441, 1.0
    %v1446 = vadd.f32 %v1442, 1.0
    %v1447 = vadd.f32 %v1443, 1.0
    %v1448 = vmul.f32 %v1420, %v1444
    %v1449 = vmul.f32 %v1421, %v1445
    %v1450 = vmul.f32 %v1422, %v1446
    %v1451 = vmul.f32 %v1423, %v1447
    %s1452 = scalar_lea.vmem %s4, 128
    %v1453 = vld [vmem:[%s1452] sm:$0xff]
    %v1454 = vld [vmem:[%s1452 + $0x8] sm:$0xff]
    %v1455 = vld [vmem:[%s1452 + $0x10] sm:$0xff]
    %v1456 = vld [vmem:[%s1452 + $0x18] sm:$0xff]
    %v1457 = vperm.slane %v89, 7
    %v1459 = vsel %vm97, %v1448, 0
    %v1462 = vsel %vm97, %v1449, 0
    %v1465 = vsel %vm97, %v1450, 0
    %v1468 = vsel %vm97, %v1451, 0
    %1470 = vmatpush.msra.mxu0 0.0
    %1471 = vmatpush.msra.mxu0 0.0
    %1472 = vmatpush.msra.mxu0 0.0
    %1473 = vmatpush.msra.mxu0 0.0
    %1474 = vmatpush.msra.mxu0 0.0
    %1475 = vmatpush.msra.mxu0 0.0
    %1476 = vmatpush.msra.mxu0 0.0
    %1477 = vmatpush.msra.mxu0 0.0
    %1478 = vmatpush.msra.mxu0 0.0
    %1479 = vmatpush.msra.mxu0 0.0
    %1480 = vmatpush.msra.mxu0 0.0
    %1481 = vmatpush.msra.mxu0 0.0
    %1482 = vmatpush.msra.mxu0 %v1456
    %1483 = vmatpush.msra.mxu0 %v1455
    %1484 = vmatpush.msra.mxu0 %v1454
    %1485 = vmatpush.msra.mxu0 %v1453
    %1486 = vmatmul.f32.gmra.mxu0 %v1459
    %v1487 = vpop.f32.mrf.mxu0
    %v1488 = vadd.f32 %v1457, %v1487
    %1489 = vmatmul.f32.gmra.mxu0 %v1462
    %v1490 = vpop.f32.mrf.mxu0
    %v1491 = vadd.f32 %v1457, %v1490
    %1492 = vmatmul.f32.gmra.mxu0 %v1465
    %v1493 = vpop.f32.mrf.mxu0
    %v1494 = vadd.f32 %v1457, %v1493
    %1495 = vmatmul.f32.gmra.mxu0 %v1468
    %v1496 = vpop.f32.mrf.mxu0
    %v1497 = vadd.f32 %v1457, %v1496
    %1498 = vdwg.mxu0
    %v1499 = vadd.f32 %v1115, %v1488
    %v1500 = vadd.f32 %v1116, %v1491
    %v1501 = vadd.f32 %v1117, %v1494
    %v1502 = vadd.f32 %v1118, %v1497
    %v1503 = vsel %vm97, %v1499, 0.0
    %1504 = vadd.xlane.f32.xlu0 %v1503
    %v1505 = vpop.xlane.xlu0 %1504
    %v1506 = vsel %vm97, %v1500, 0.0
    %1507 = vadd.xlane.f32.xlu0 %v1506
    %v1508 = vpop.xlane.xlu0 %1507
    %v1509 = vsel %vm97, %v1501, 0.0
    %1510 = vadd.xlane.f32.xlu0 %v1509
    %v1511 = vpop.xlane.xlu0 %1510
    %v1512 = vsel %vm97, %v1502, 0.0
    %1513 = vadd.xlane.f32.xlu0 %v1512
    %v1514 = vpop.xlane.xlu0 %1513
    %v1515 = vmul.f32 %v1505, %v1032
    %v1516 = vmul.f32 %v1508, %v1032
    %v1517 = vmul.f32 %v1511, %v1032
    %v1518 = vmul.f32 %v1514, %v1032
    %v1519 = vsub.f32 %v1499, %v1515
    %v1520 = vsub.f32 %v1500, %v1516
    %v1521 = vsub.f32 %v1501, %v1517
    %v1522 = vsub.f32 %v1502, %v1518
    %v1523 = vmul.f32 %v1519, %v1519
    %v1524 = vmul.f32 %v1520, %v1520
    %v1525 = vmul.f32 %v1521, %v1521
    %v1526 = vmul.f32 %v1522, %v1522
    %v1527 = vsel %vm97, %v1523, 0.0
    %1528 = vadd.xlane.f32.xlu0 %v1527
    %v1529 = vpop.xlane.xlu0 %1528
    %v1530 = vsel %vm97, %v1524, 0.0
    %1531 = vadd.xlane.f32.xlu0 %v1530
    %v1532 = vpop.xlane.xlu0 %1531
    %v1533 = vsel %vm97, %v1525, 0.0
    %1534 = vadd.xlane.f32.xlu0 %v1533
    %v1535 = vpop.xlane.xlu0 %1534
    %v1536 = vsel %vm97, %v1526, 0.0
    %1537 = vadd.xlane.f32.xlu0 %v1536
    %v1538 = vpop.xlane.xlu0 %1537
    %v1539 = vmul.f32 %v1529, %v1032
    %v1540 = vmul.f32 %v1532, %v1032
    %v1541 = vmul.f32 %v1535, %v1032
    %v1542 = vmul.f32 %v1538, %v1032
    %v1543 = vadd.f32 %v1539, 1e-05
    %v1544 = vadd.f32 %v1540, 1e-05
    %v1545 = vadd.f32 %v1541, 1e-05
    %v1546 = vadd.f32 %v1542, 1e-05
    %v1547 = vrsqrt.pop %v1543
    %v1548 = vmul.f32 %v1547, %v1543
    %v1549 = vmul.f32 %v1548, %v1547
    %v1550 = vmul.f32 0.5, %v1549
    %v1551 = vsub.f32 1.5, %v1550
    %v1552 = vmul.f32 %v1547, %v1551
    %vm1553 = vweird.f32 %v1543
    %vm1554 = vweird.f32 %v1547
    %vm1555 = vmor %vm1553, %vm1554
    %v1556 = vsel %vm1555, %v1547, %v1552
    %v1557 = vrsqrt.pop %v1544
    %v1558 = vmul.f32 %v1557, %v1544
    %v1559 = vmul.f32 %v1558, %v1557
    %v1560 = vmul.f32 0.5, %v1559
    %v1561 = vsub.f32 1.5, %v1560
    %v1562 = vmul.f32 %v1557, %v1561
    %vm1563 = vweird.f32 %v1544
    %vm1564 = vweird.f32 %v1557
    %vm1565 = vmor %vm1563, %vm1564
    %v1566 = vsel %vm1565, %v1557, %v1562
    %v1567 = vrsqrt.pop %v1545
    %v1568 = vmul.f32 %v1567, %v1545
    %v1569 = vmul.f32 %v1568, %v1567
    %v1570 = vmul.f32 0.5, %v1569
    %v1571 = vsub.f32 1.5, %v1570
    %v1572 = vmul.f32 %v1567, %v1571
    %vm1573 = vweird.f32 %v1545
    %vm1574 = vweird.f32 %v1567
    %vm1575 = vmor %vm1573, %vm1574
    %v1576 = vsel %vm1575, %v1567, %v1572
    %v1577 = vrsqrt.pop %v1546
    %v1578 = vmul.f32 %v1577, %v1546
    %v1579 = vmul.f32 %v1578, %v1577
    %v1580 = vmul.f32 0.5, %v1579
    %v1581 = vsub.f32 1.5, %v1580
    %v1582 = vmul.f32 %v1577, %v1581
    %vm1583 = vweird.f32 %v1546
    %vm1584 = vweird.f32 %v1577
    %vm1585 = vmor %vm1583, %vm1584
    %v1586 = vsel %vm1585, %v1577, %v1582
    %v1587 = vmul.f32 %v1519, %v1556
    %v1588 = vmul.f32 %v1520, %v1566
    %v1589 = vmul.f32 %v1521, %v1576
    %v1590 = vmul.f32 %v1522, %v1586
    %v1591 = vperm.slane %v90, 0
    %v1592 = vmul.f32 %v1587, %v1591
    %v1593 = vmul.f32 %v1588, %v1591
    %v1594 = vmul.f32 %v1589, %v1591
    %v1595 = vmul.f32 %v1590, %v1591
    %v1596 = vperm.slane %v90, 1
    %v1597 = vadd.f32 %v1592, %v1596
    %v1598 = vadd.f32 %v1593, %v1596
    %v1599 = vadd.f32 %v1594, %v1596
    %v1600 = vadd.f32 %v1595, %v1596
    %v1601 = vld [vmem:[%s5] sm:$0xff]
    %v1602 = vld [vmem:[%s5 + $0x8] sm:$0xff]
    %v1603 = vld [vmem:[%s5 + $0x10] sm:$0xff]
    %v1604 = vld [vmem:[%s5 + $0x18] sm:$0xff]
    %v1605 = vld [vmem:[%s5 + $0x20] sm:$0xff]
    %v1606 = vld [vmem:[%s5 + $0x28] sm:$0xff]
    %v1607 = vld [vmem:[%s5 + $0x30] sm:$0xff]
    %v1608 = vld [vmem:[%s5 + $0x38] sm:$0xff]
    %v1609 = vld [vmem:[%s5 + $0x40] sm:$0xff]
    %v1610 = vld [vmem:[%s5 + $0x48] sm:$0xff]
    %v1611 = vld [vmem:[%s5 + $0x50] sm:$0xff]
    %v1612 = vld [vmem:[%s5 + $0x58] sm:$0xff]
    %v1613 = vld [vmem:[%s5 + $0x60] sm:$0x1]
    %v1614 = vperm.slane %v1613, 0
    %v1616 = vsel %vm97, %v1597, 0
    %v1619 = vsel %vm97, %v1598, 0
    %v1622 = vsel %vm97, %v1599, 0
    %v1625 = vsel %vm97, %v1600, 0
    %1627 = vmatpush.msra.mxu0 0.0
    %1628 = vmatpush.msra.mxu0 0.0
    %1629 = vmatpush.msra.mxu0 0.0
    %1630 = vmatpush.msra.mxu0 0.0
    %1631 = vmatpush.msra.mxu0 0.0
    %1632 = vmatpush.msra.mxu0 0.0
    %1633 = vmatpush.msra.mxu0 0.0
    %1634 = vmatpush.msra.mxu0 0.0
    %1635 = vmatpush.msra.mxu0 0.0
    %1636 = vmatpush.msra.mxu0 0.0
    %1637 = vmatpush.msra.mxu0 0.0
    %1638 = vmatpush.msra.mxu0 0.0
    %1639 = vmatpush.msra.mxu0 %v1604
    %1640 = vmatpush.msra.mxu0 %v1603
    %1641 = vmatpush.msra.mxu0 %v1602
    %1642 = vmatpush.msra.mxu0 %v1601
    %1643 = vmatmul.f32.gmra.mxu0 %v1616
    %v1644 = vpop.f32.mrf.mxu0
    %v1645 = vadd.f32 %v1614, %v1644
    %1646 = vmatmul.f32.gmra.mxu0 %v1619
    %v1647 = vpop.f32.mrf.mxu0
    %v1648 = vadd.f32 %v1614, %v1647
    %1649 = vmatmul.f32.gmra.mxu0 %v1622
    %v1650 = vpop.f32.mrf.mxu0
    %v1651 = vadd.f32 %v1614, %v1650
    %1652 = vmatmul.f32.gmra.mxu0 %v1625
    %v1653 = vpop.f32.mrf.mxu0
    %v1654 = vadd.f32 %v1614, %v1653
    %1655 = vdwg.mxu0
    %v1656 = vmax.f32 %v1645, 0.0
    %v1657 = vmax.f32 %v1648, 0.0
    %v1658 = vmax.f32 %v1651, 0.0
    %v1659 = vmax.f32 %v1654, 0.0
    %v1660 = vperm.slane %v90, 2
    %vm1661 = vcmask 523264
    %v1663 = vsel %vm1661, %v1656, 0
    %v1666 = vsel %vm1661, %v1657, 0
    %v1669 = vsel %vm1661, %v1658, 0
    %v1672 = vsel %vm1661, %v1659, 0
    %1674 = vmatpush.msra.mxu0 0.0
    %1675 = vmatpush.msra.mxu0 0.0
    %1676 = vmatpush.msra.mxu0 0.0
    %1677 = vmatpush.msra.mxu0 0.0
    %1678 = vmatpush.msra.mxu0 0.0
    %1679 = vmatpush.msra.mxu0 0.0
    %1680 = vmatpush.msra.mxu0 0.0
    %1681 = vmatpush.msra.mxu0 0.0
    %1682 = vmatpush.msra.mxu0 %v1612
    %1683 = vmatpush.msra.mxu0 %v1611
    %1684 = vmatpush.msra.mxu0 %v1610
    %1685 = vmatpush.msra.mxu0 %v1609
    %1686 = vmatpush.msra.mxu0 %v1608
    %1687 = vmatpush.msra.mxu0 %v1607
    %1688 = vmatpush.msra.mxu0 %v1606
    %1689 = vmatpush.msra.mxu0 %v1605
    %1690 = vmatmul.f32.gmra.mxu0 %v1663
    %v1691 = vpop.f32.mrf.mxu0
    %v1692 = vadd.f32 %v1660, %v1691
    %1693 = vmatmul.f32.gmra.mxu0 %v1666
    %v1694 = vpop.f32.mrf.mxu0
    %v1695 = vadd.f32 %v1660, %v1694
    %1696 = vmatmul.f32.gmra.mxu0 %v1669
    %v1697 = vpop.f32.mrf.mxu0
    %v1698 = vadd.f32 %v1660, %v1697
    %1699 = vmatmul.f32.gmra.mxu0 %v1672
    %v1700 = vpop.f32.mrf.mxu0
    %v1701 = vadd.f32 %v1660, %v1700
    %1702 = vdwg.mxu0
    %v1703 = vadd.f32 %v1597, %v1692
    %v1704 = vadd.f32 %v1598, %v1695
    %v1705 = vadd.f32 %v1599, %v1698
    %v1706 = vadd.f32 %v1600, %v1701
    %v1707 = vsel %vm97, %v1703, 0.0
    %1708 = vadd.xlane.f32.xlu0 %v1707
    %v1709 = vpop.xlane.xlu0 %1708
    %v1710 = vsel %vm97, %v1704, 0.0
    %1711 = vadd.xlane.f32.xlu0 %v1710
    %v1712 = vpop.xlane.xlu0 %1711
    %v1713 = vsel %vm97, %v1705, 0.0
    %1714 = vadd.xlane.f32.xlu0 %v1713
    %v1715 = vpop.xlane.xlu0 %1714
    %v1716 = vsel %vm97, %v1706, 0.0
    %1717 = vadd.xlane.f32.xlu0 %v1716
    %v1718 = vpop.xlane.xlu0 %1717
    %v1719 = vmul.f32 %v1709, %v1032
    %v1720 = vmul.f32 %v1712, %v1032
    %v1721 = vmul.f32 %v1715, %v1032
    %v1722 = vmul.f32 %v1718, %v1032
    %v1723 = vsub.f32 %v1703, %v1719
    %v1724 = vsub.f32 %v1704, %v1720
    %v1725 = vsub.f32 %v1705, %v1721
    %v1726 = vsub.f32 %v1706, %v1722
    %v1727 = vmul.f32 %v1723, %v1723
    %v1728 = vmul.f32 %v1724, %v1724
    %v1729 = vmul.f32 %v1725, %v1725
    %v1730 = vmul.f32 %v1726, %v1726
    %v1731 = vsel %vm97, %v1727, 0.0
    %1732 = vadd.xlane.f32.xlu0 %v1731
    %v1733 = vpop.xlane.xlu0 %1732
    %v1734 = vsel %vm97, %v1728, 0.0
    %1735 = vadd.xlane.f32.xlu0 %v1734
    %v1736 = vpop.xlane.xlu0 %1735
    %v1737 = vsel %vm97, %v1729, 0.0
    %1738 = vadd.xlane.f32.xlu0 %v1737
    %v1739 = vpop.xlane.xlu0 %1738
    %v1740 = vsel %vm97, %v1730, 0.0
    %1741 = vadd.xlane.f32.xlu0 %v1740
    %v1742 = vpop.xlane.xlu0 %1741
    %v1743 = vmul.f32 %v1733, %v1032
    %v1744 = vmul.f32 %v1736, %v1032
    %v1745 = vmul.f32 %v1739, %v1032
    %v1746 = vmul.f32 %v1742, %v1032
    %v1747 = vadd.f32 %v1743, 1e-05
    %v1748 = vadd.f32 %v1744, 1e-05
    %v1749 = vadd.f32 %v1745, 1e-05
    %v1750 = vadd.f32 %v1746, 1e-05
    %v1751 = vrsqrt.pop %v1747
    %v1752 = vmul.f32 %v1751, %v1747
    %v1753 = vmul.f32 %v1752, %v1751
    %v1754 = vmul.f32 0.5, %v1753
    %v1755 = vsub.f32 1.5, %v1754
    %v1756 = vmul.f32 %v1751, %v1755
    %vm1757 = vweird.f32 %v1747
    %vm1758 = vweird.f32 %v1751
    %vm1759 = vmor %vm1757, %vm1758
    %v1760 = vsel %vm1759, %v1751, %v1756
    %v1761 = vrsqrt.pop %v1748
    %v1762 = vmul.f32 %v1761, %v1748
    %v1763 = vmul.f32 %v1762, %v1761
    %v1764 = vmul.f32 0.5, %v1763
    %v1765 = vsub.f32 1.5, %v1764
    %v1766 = vmul.f32 %v1761, %v1765
    %vm1767 = vweird.f32 %v1748
    %vm1768 = vweird.f32 %v1761
    %vm1769 = vmor %vm1767, %vm1768
    %v1770 = vsel %vm1769, %v1761, %v1766
    %v1771 = vrsqrt.pop %v1749
    %v1772 = vmul.f32 %v1771, %v1749
    %v1773 = vmul.f32 %v1772, %v1771
    %v1774 = vmul.f32 0.5, %v1773
    %v1775 = vsub.f32 1.5, %v1774
    %v1776 = vmul.f32 %v1771, %v1775
    %vm1777 = vweird.f32 %v1749
    %vm1778 = vweird.f32 %v1771
    %vm1779 = vmor %vm1777, %vm1778
    %v1780 = vsel %vm1779, %v1771, %v1776
    %v1781 = vrsqrt.pop %v1750
    %v1782 = vmul.f32 %v1781, %v1750
    %v1783 = vmul.f32 %v1782, %v1781
    %v1784 = vmul.f32 0.5, %v1783
    %v1785 = vsub.f32 1.5, %v1784
    %v1786 = vmul.f32 %v1781, %v1785
    %vm1787 = vweird.f32 %v1750
    %vm1788 = vweird.f32 %v1781
    %vm1789 = vmor %vm1787, %vm1788
    %v1790 = vsel %vm1789, %v1781, %v1786
    %v1791 = vmul.f32 %v1723, %v1760
    %v1792 = vmul.f32 %v1724, %v1770
    %v1793 = vmul.f32 %v1725, %v1780
    %v1794 = vmul.f32 %v1726, %v1790
    %v1795 = vperm.slane %v90, 3
    %v1796 = vmul.f32 %v1791, %v1795
    %v1797 = vmul.f32 %v1792, %v1795
    %v1798 = vmul.f32 %v1793, %v1795
    %v1799 = vmul.f32 %v1794, %v1795
    %v1800 = vperm.slane %v90, 4
    %v1801 = vadd.f32 %v1796, %v1800
    %v1802 = vadd.f32 %v1797, %v1800
    %v1803 = vadd.f32 %v1798, %v1800
    %v1804 = vadd.f32 %v1799, %v1800
    %1805 = vst.msk [vmem:[#allocation8] sm:$0xff] %vm97, %v1801
    %1806 = vst.msk [vmem:[#allocation8 + $0x8] sm:$0xff] %vm97, %v1802
    %1807 = vst.msk [vmem:[#allocation8 + $0x10] sm:$0xff] %vm97, %v1803
    %1808 = vst.msk [vmem:[#allocation8 + $0x18] sm:$0xff] %vm97, %v1804
    // Predicated region
    $region46: #{tpu_custom_call.1} parent=1 // pred_check
      _
    $region47: #{tpu_custom_call.1} parent=1 // pred_check_branch
      %1810 = sbr.rel (0) target = $region49
    $region48: #{tpu_custom_call.1} parent=1 // pred_region
      %1812 = vsyncadd [#allocation4], 0
      %s1813 = sshll.u32 [#allocation8], 4
      %s1814 = int_to_ptr.vmem [resolvable:$true] %s1813
      %s1815 = sshll.u32 %s8, 4
      %s1816 = int_to_ptr.hbm [resolvable:$true] %s1815
      %1821 = dma.vmem_to_hbm [thread:$0]  %s1814, 512, %s1816, [#allocation4], 128, 128, 8
    $region49: #{tpu_custom_call.1} parent=1 // pred_fallthru
      _
    // Predicated region
    $region50: #{tpu_custom_call.1} parent=1 // pred_check
      _
    $region51: #{tpu_custom_call.1} parent=1 // pred_check_branch
      %1823 = sbr.rel (0) target = $region53
    $region52: #{tpu_custom_call.1} parent=1 // pred_region
      %1825 = dma.done [#allocation4], 512
    $region53: #{tpu_custom_call.1} parent=1 // pred_fallthru
      _
    %1826 = vsyncpa [#allocation3], 1
    %1827 = vsyncpa [#allocation6], 1
    %1828 = vsyncpa [#allocation4], 1

</llo_original>
